<compile_context>
chip_gen: v7x
topology: tpu7x:2x2x1
jax: 0.10.0
libtpu: 0.0.40
codegen_flags: <defaults>
</compile_context>

<pallas_src>
import functools

import jax
import jax.numpy as jnp
from jax.experimental import pallas as pl
from jax.experimental.pallas import tpu as pltpu

LANE = 128      # lane width (last dim)
SUBLANE = 8     # sublane width (second-to-last dim)


def _round_up(x, m):
    return ((x + m - 1) // m) * m


def _num_tensorcores():
    """Best-effort TC-per-chip count (megacore parts benefit from >=2 grid steps)."""
    try:
        kind = jax.devices()[0].device_kind.lower()
    except Exception:
        return 1
    for tag in ("v7", "v5p", "v4"):   # megacore / 2-TC chips
        if tag in kind:
            return 2
    return 1                          # v5e / v6e: single TC


# ---------------------------------------------------------------------------
# Kernel: one batch tile through every layer; activations stay in VMEM/vregs.
# ---------------------------------------------------------------------------
def _fused_mlp_kernel(*refs, num_layers: int):
    # refs = (x_ref, w0, b0, w1, b1, ..., w_{L-1}, b_{L-1}, o_ref)
    x_ref = refs[0]
    o_ref = refs[-1]
    wb = refs[1:-1]

    h = x_ref[...]                                    # bf16 activations
    for l in range(num_layers):                       # static unroll (L is small)
        w = wb[2 * l][...]                            # (D_in_pad, D_out_pad) bf16
        b = wb[2 * l + 1][...]                        # (1, D_out_pad) f32
        # bf16 x bf16 -> f32 accumulate on the MXU; bias + SiLU in f32 (VPU/EUP).
        y = jnp.dot(h.astype(jnp.bfloat16), w,
                    preferred_element_type=jnp.float32) + b
        if l < num_layers - 1:
            y = y * jax.nn.sigmoid(y)                 # SiLU; sigmoid -> EUP slot
        h = y
    o_ref[...] = h.astype(o_ref.dtype)


# ---------------------------------------------------------------------------
# Wrapper: batch tiling, lane padding, VMEM sizing, megacore semantics.
# ---------------------------------------------------------------------------
def _mlp_forward_impl(padded_params, x, out_dim, *, single_buffer_weights):
    """padded_params: list of (w_pad bf16 (Din_p, Dout_p), b_pad f32 (1, Dout_p)).
    x: (B, D_in) f32. Returns (B, out_dim) f32."""
    B, D_in = x.shape
    L = len(padded_params)
    d_in_pad = padded_params[0][0].shape[0]
    d_out_pad = padded_params[-1][0].shape[1]
    mid_pad_max = max(int(w.shape[1]) for (w, _) in padded_params)

    in_itemsize = 2    # bf16 activations streamed into the kernel
    out_itemsize = 4   # f32 output

    # ---- adaptive batch tile ------------------------------------------------
    b_pad0 = _round_up(max(B, 1), SUBLANE)

    # VMEM budget for the double-buffered activation tiles (input + output).
    tile_vmem_budget = 24 << 20
    bytes_per_row = 2 * d_in_pad * in_itemsize + 2 * d_out_pad * out_itemsize
    tile_b_cap = max(SUBLANE,
                     (tile_vmem_budget // bytes_per_row) // SUBLANE * SUBLANE)
    tile_b_cap = min(tile_b_cap, 4096)   # keep per-step scratch/latency moderate

    n_tc = _num_tensorcores()
    if n_tc > 1 and b_pad0 > SUBLANE:
        # Guarantee >= n_tc grid steps so "parallel" shards across TensorCores.
        target = _round_up(-(-b_pad0 // n_tc), SUBLANE)
    else:
        target = b_pad0                  # single TC: one big tile, no fake splits
    tile_b = max(SUBLANE, min(target, tile_b_cap))
    b_pad = _round_up(b_pad0, tile_b)
    grid = (b_pad // tile_b,)

    # Zero-pad activations once (lane dim -> 128 multiple, batch -> tile_b),
    # stored bf16 to halve the dominant HBM->VMEM input stream.
    x_p = (jnp.zeros((b_pad, d_in_pad), jnp.bfloat16)
           .at[:B, :D_in].set(x.astype(jnp.bfloat16)))

    # ---- specs ---------------------------------------------------------------
    def _const_map(i):
        return (0, 0)

    in_specs = [pl.BlockSpec((tile_b, d_in_pad), lambda i: (i, 0))]
    args = [x_p]
    for (w, b) in padded_params:
        if single_buffer_weights:
            # Constant index_map => resident once; no point double-buffering.
            in_specs.append(pl.BlockSpec(w.shape, _const_map,
                                         pipeline_mode=pl.Buffered(1)))
            in_specs.append(pl.BlockSpec(b.shape, _const_map,
                                         pipeline_mode=pl.Buffered(1)))
        else:
            in_specs.append(pl.BlockSpec(w.shape, _const_map))
            in_specs.append(pl.BlockSpec(b.shape, _const_map))
        args.append(w)
        args.append(b)
    out_spec = pl.BlockSpec((tile_b, d_out_pad), lambda i: (i, 0))

    # ---- VMEM limit derived from the actual footprint ------------------------
    weight_bytes = sum(int(w.size) * w.dtype.itemsize + int(b.size) * b.dtype.itemsize
                       for (w, b) in padded_params)
    wt_bufs = 1 if single_buffer_weights else 2
    act_tile_bytes = (2 * tile_b * d_in_pad * in_itemsize
                      + 2 * tile_b * d_out_pad * out_itemsize)
    interm_bytes = 2 * tile_b * mid_pad_max * 4      # live f32 intermediates
    vmem_needed = act_tile_bytes + wt_bufs * weight_bytes + interm_bytes
    vmem_limit = int(min(64 << 20,                   # stay under v7x physical VMEM
                         max(32 << 20, int(vmem_needed * 1.5) + (4 << 20))))

    # ---- advisory cost estimate ----------------------------------------------
    flops = 2 * b_pad * sum(int(w.shape[0]) * int(w.shape[1])
                            for (w, _) in padded_params)
    transcendentals = b_pad * sum(int(w.shape[1])
                                  for (w, _) in padded_params[:-1])
    bytes_accessed = (x_p.size * in_itemsize + weight_bytes
                      + b_pad * d_out_pad * out_itemsize)

    kernel = functools.partial(_fused_mlp_kernel, num_layers=L)
    out_p = pl.pallas_call(
        kernel,
        out_shape=jax.ShapeDtypeStruct((b_pad, d_out_pad), jnp.float32),
        grid=grid,
        in_specs=in_specs,
        out_specs=out_spec,
        compiler_params=pltpu.CompilerParams(
            dimension_semantics=("parallel",),       # shard batch tiles across TCs
            vmem_limit_bytes=vmem_limit),
        cost_estimate=pl.CostEstimate(
            flops=flops,
            transcendentals=transcendentals,
            bytes_accessed=bytes_accessed),
    )(*args)

    return out_p[:B, :out_dim]


def mlp_forward_fused(padded_params, x, out_dim):
    try:
        return _mlp_forward_impl(padded_params, x, out_dim,
                                 single_buffer_weights=True)
    except Exception:
        # Fallback if this jax build rejects pl.Buffered(1) on invariant blocks.
        return _mlp_forward_impl(padded_params, x, out_dim,
                                 single_buffer_weights=False)


# ---------------------------------------------------------------------------
# Parameter setup (matches PyTorch nn.Linear layout / init) + lane padding.
# ---------------------------------------------------------------------------
def init_mlp_params(key, in_dim, num_mid_layers, mid_dim=32, out_dim=2):
    """Weights stored as (in_features, out_features) so y = x @ W + b."""
    dims = [(in_dim, mid_dim)] + [(mid_dim, mid_dim)] * num_mid_layers + [(mid_dim, out_dim)]
    params = []
    for (d_in, d_out) in dims:
        key, kw, kb = jax.random.split(key, 3)
        bound = 1.0 / (d_in ** 0.5)   # PyTorch default: U(-1/sqrt(fan_in), +)
        w = jax.random.uniform(kw, (d_in, d_out), jnp.float32, -bound, bound)
        b = jax.random.uniform(kb, (d_out,), jnp.float32, -bound, bound)
        params.append((w, b))
    return params


def pad_params(params):
    """Zero-pad every feature dim to a multiple of 128 (lane-dense MXU / stores).
    Weights cast to bf16 (MXU-native); biases kept f32 for the f32 epilogue.
    Zero padding keeps the math exact: padded lanes stay 0 through SiLU."""
    padded = []
    for (w, b) in params:
        d_in, d_out = w.shape
        d_in_p = _round_up(d_in, LANE)
        d_out_p = _round_up(d_out, LANE)
        w_p = (jnp.zeros((d_in_p, d_out_p), jnp.bfloat16)
               .at[:d_in, :d_out].set(w.astype(jnp.bfloat16)))
        b_p = jnp.zeros((1, d_out_p), jnp.float32).at[0, :d_out].set(b)
        padded.append((w_p, b_p))
    return padded


def mlp_reference(params, x):
    n = len(params)
    for i, (w, b) in enumerate(params):
        x = x @ w + b
        if i < n - 1:
            x = x * jax.nn.sigmoid(x)
    return x


if __name__ == "__main__":
    key = jax.random.PRNGKey(0)
    in_dim, num_mid_layers, mid_dim, out_dim = 16, 2, 32, 2
    batch = 8

    key, kx, kp = jax.random.split(key, 3)
    x = jax.random.normal(kx, (batch, in_dim), jnp.float32)
    params = init_mlp_params(kp, in_dim, num_mid_layers, mid_dim, out_dim)
    padded = pad_params(params)   # padding + bf16 cast done once at setup time

    out = mlp_forward_fused(padded, x, out_dim)
    out = jax.block_until_ready(out)

    ref = mlp_reference(params, x)   # f32 reference
    assert out.shape == (batch, out_dim)
    # bf16 matmul operands with f32 accumulate: relaxed tolerance vs f32 ref.
    assert jnp.allclose(out, ref, atol=2e-2, rtol=2e-2), "mismatch vs JAX reference"

    print("KERNEL_OK")
</pallas_src>

<mosaic_0001>
module attributes {stable_mosaic.version = 11 : i64} {
  func.func @_fused_mlp_kernel(%arg0: i32, %arg1: memref<8x128xbf16, #tpu.memory_space<vmem>>, %arg2: memref<128x128xbf16, #tpu.memory_space<vmem>>, %arg3: memref<1x128xf32, #tpu.memory_space<vmem>>, %arg4: memref<128x128xbf16, #tpu.memory_space<vmem>>, %arg5: memref<1x128xf32, #tpu.memory_space<vmem>>, %arg6: memref<128x128xbf16, #tpu.memory_space<vmem>>, %arg7: memref<1x128xf32, #tpu.memory_space<vmem>>, %arg8: memref<128x128xbf16, #tpu.memory_space<vmem>>, %arg9: memref<1x128xf32, #tpu.memory_space<vmem>>, %arg10: memref<8x128xf32, #tpu.memory_space<vmem>>) attributes {dimension_semantics = [#tpu.dimension_semantics<parallel>], iteration_bounds = array<i64: 1>, scalar_prefetch = 0 : i64, scratch_operands = 0 : i64, tpu.core_type = #tpu.core_type<tc>, window_params = [{transform_indices = @transform_0, window_bounds = array<i64: 8, 128>}, {pipeline_mode = #tpu.pipeline_mode<synchronous>, transform_indices = @transform_1, window_bounds = array<i64: 128, 128>}, {pipeline_mode = #tpu.pipeline_mode<synchronous>, transform_indices = @transform_2, window_bounds = array<i64: 1, 128>}, {pipeline_mode = #tpu.pipeline_mode<synchronous>, transform_indices = @transform_3, window_bounds = array<i64: 128, 128>}, {pipeline_mode = #tpu.pipeline_mode<synchronous>, transform_indices = @transform_4, window_bounds = array<i64: 1, 128>}, {pipeline_mode = #tpu.pipeline_mode<synchronous>, transform_indices = @transform_5, window_bounds = array<i64: 128, 128>}, {pipeline_mode = #tpu.pipeline_mode<synchronous>, transform_indices = @transform_6, window_bounds = array<i64: 1, 128>}, {pipeline_mode = #tpu.pipeline_mode<synchronous>, transform_indices = @transform_7, window_bounds = array<i64: 128, 128>}, {pipeline_mode = #tpu.pipeline_mode<synchronous>, transform_indices = @transform_8, window_bounds = array<i64: 1, 128>}, {transform_indices = @transform_9, window_bounds = array<i64: 8, 128>}]} {
    %c0 = arith.constant 0 : index
    %c0_0 = arith.constant 0 : index
    %0 = vector.load %arg1[%c0, %c0_0] : memref<8x128xbf16, #tpu.memory_space<vmem>>, vector<8x128xbf16>
    %c0_1 = arith.constant 0 : index
    %c0_2 = arith.constant 0 : index
    %1 = vector.load %arg2[%c0_1, %c0_2] : memref<128x128xbf16, #tpu.memory_space<vmem>>, vector<128x128xbf16>
    %c0_3 = arith.constant 0 : index
    %c0_4 = arith.constant 0 : index
    %2 = vector.load %arg3[%c0_3, %c0_4] : memref<1x128xf32, #tpu.memory_space<vmem>>, vector<1x128xf32>
    %cst = arith.constant dense<0.000000e+00> : vector<8x128xf32>
    %3 = tpu.matmul %0, %1, %cst {dimension_numbers = #tpu.dot_dimension_numbers<[1], [0], [0], [1], [0, 0, 1, 1], [], []>} : vector<8x128xbf16>, vector<128x128xbf16>, vector<8x128xf32> -> vector<8x128xf32>
    %4 = vector.broadcast %2 : vector<1x128xf32> to vector<8x128xf32>
    %5 = arith.addf %3, %4 : vector<8x128xf32>
    %6 = arith.negf %5 : vector<8x128xf32>
    %7 = math.exp %6 : vector<8x128xf32>
    %cst_5 = arith.constant 1.000000e+00 : f32
    %8 = vector.broadcast %cst_5 : f32 to vector<8x128xf32>
    %9 = arith.addf %8, %7 : vector<8x128xf32>
    %10 = arith.divf %8, %9 : vector<8x128xf32>
    %11 = arith.mulf %5, %10 : vector<8x128xf32>
    %c0_6 = arith.constant 0 : index
    %c0_7 = arith.constant 0 : index
    %12 = vector.load %arg4[%c0_6, %c0_7] : memref<128x128xbf16, #tpu.memory_space<vmem>>, vector<128x128xbf16>
    %c0_8 = arith.constant 0 : index
    %c0_9 = arith.constant 0 : index
    %13 = vector.load %arg5[%c0_8, %c0_9] : memref<1x128xf32, #tpu.memory_space<vmem>>, vector<1x128xf32>
    %14 = arith.truncf %11 : vector<8x128xf32> to vector<8x128xbf16>
    %cst_10 = arith.constant dense<0.000000e+00> : vector<8x128xf32>
    %15 = tpu.matmul %14, %12, %cst_10 {dimension_numbers = #tpu.dot_dimension_numbers<[1], [0], [0], [1], [0, 0, 1, 1], [], []>} : vector<8x128xbf16>, vector<128x128xbf16>, vector<8x128xf32> -> vector<8x128xf32>
    %16 = vector.broadcast %13 : vector<1x128xf32> to vector<8x128xf32>
    %17 = arith.addf %15, %16 : vector<8x128xf32>
    %18 = arith.negf %17 : vector<8x128xf32>
    %19 = math.exp %18 : vector<8x128xf32>
    %cst_11 = arith.constant 1.000000e+00 : f32
    %20 = vector.broadcast %cst_11 : f32 to vector<8x128xf32>
    %21 = arith.addf %20, %19 : vector<8x128xf32>
    %22 = arith.divf %20, %21 : vector<8x128xf32>
    %23 = arith.mulf %17, %22 : vector<8x128xf32>
    %c0_12 = arith.constant 0 : index
    %c0_13 = arith.constant 0 : index
    %24 = vector.load %arg6[%c0_12, %c0_13] : memref<128x128xbf16, #tpu.memory_space<vmem>>, vector<128x128xbf16>
    %c0_14 = arith.constant 0 : index
    %c0_15 = arith.constant 0 : index
    %25 = vector.load %arg7[%c0_14, %c0_15] : memref<1x128xf32, #tpu.memory_space<vmem>>, vector<1x128xf32>
    %26 = arith.truncf %23 : vector<8x128xf32> to vector<8x128xbf16>
    %cst_16 = arith.constant dense<0.000000e+00> : vector<8x128xf32>
    %27 = tpu.matmul %26, %24, %cst_16 {dimension_numbers = #tpu.dot_dimension_numbers<[1], [0], [0], [1], [0, 0, 1, 1], [], []>} : vector<8x128xbf16>, vector<128x128xbf16>, vector<8x128xf32> -> vector<8x128xf32>
    %28 = vector.broadcast %25 : vector<1x128xf32> to vector<8x128xf32>
    %29 = arith.addf %27, %28 : vector<8x128xf32>
    %30 = arith.negf %29 : vector<8x128xf32>
    %31 = math.exp %30 : vector<8x128xf32>
    %cst_17 = arith.constant 1.000000e+00 : f32
    %32 = vector.broadcast %cst_17 : f32 to vector<8x128xf32>
    %33 = arith.addf %32, %31 : vector<8x128xf32>
    %34 = arith.divf %32, %33 : vector<8x128xf32>
    %35 = arith.mulf %29, %34 : vector<8x128xf32>
    %c0_18 = arith.constant 0 : index
    %c0_19 = arith.constant 0 : index
    %36 = vector.load %arg8[%c0_18, %c0_19] : memref<128x128xbf16, #tpu.memory_space<vmem>>, vector<128x128xbf16>
    %c0_20 = arith.constant 0 : index
    %c0_21 = arith.constant 0 : index
    %37 = vector.load %arg9[%c0_20, %c0_21] : memref<1x128xf32, #tpu.memory_space<vmem>>, vector<1x128xf32>
    %38 = arith.truncf %35 : vector<8x128xf32> to vector<8x128xbf16>
    %cst_22 = arith.constant dense<0.000000e+00> : vector<8x128xf32>
    %39 = tpu.matmul %38, %36, %cst_22 {dimension_numbers = #tpu.dot_dimension_numbers<[1], [0], [0], [1], [0, 0, 1, 1], [], []>} : vector<8x128xbf16>, vector<128x128xbf16>, vector<8x128xf32> -> vector<8x128xf32>
    %40 = vector.broadcast %37 : vector<1x128xf32> to vector<8x128xf32>
    %41 = arith.addf %39, %40 : vector<8x128xf32>
    %c0_23 = arith.constant 0 : index
    %c0_24 = arith.constant 0 : index
    %42 = vector.load %arg10[%c0_23, %c0_24] : memref<8x128xf32, #tpu.memory_space<vmem>>, vector<8x128xf32>
    tpu.vector_store %arg10[%c0_23, %c0_24], %41 {strides = array<i32>} : memref<8x128xf32, #tpu.memory_space<vmem>>, vector<8x128xf32>,
    return
  }
  func.func @transform_0(%arg0: i32) -> (i32, i32) {
    %c0_i32 = arith.constant 0 : i32
    %c0_i32_0 = arith.constant 0 : i32
    return %arg0, %c0_i32 : i32, i32
  }
  func.func @transform_1(%arg0: i32) -> (i32, i32) {
    %c0_i32 = arith.constant 0 : i32
    %c0_i32_0 = arith.constant 0 : i32
    %c0_i32_1 = arith.constant 0 : i32
    return %c0_i32, %c0_i32_0 : i32, i32
  }
  func.func @transform_2(%arg0: i32) -> (i32, i32) {
    %c0_i32 = arith.constant 0 : i32
    %c0_i32_0 = arith.constant 0 : i32
    %c0_i32_1 = arith.constant 0 : i32
    return %c0_i32, %c0_i32_0 : i32, i32
  }
  func.func @transform_3(%arg0: i32) -> (i32, i32) {
    %c0_i32 = arith.constant 0 : i32
    %c0_i32_0 = arith.constant 0 : i32
    %c0_i32_1 = arith.constant 0 : i32
    return %c0_i32, %c0_i32_0 : i32, i32
  }
  func.func @transform_4(%arg0: i32) -> (i32, i32) {
    %c0_i32 = arith.constant 0 : i32
    %c0_i32_0 = arith.constant 0 : i32
    %c0_i32_1 = arith.constant 0 : i32
    return %c0_i32, %c0_i32_0 : i32, i32
  }
  func.func @transform_5(%arg0: i32) -> (i32, i32) {
    %c0_i32 = arith.constant 0 : i32
    %c0_i32_0 = arith.constant 0 : i32
    %c0_i32_1 = arith.constant 0 : i32
    return %c0_i32, %c0_i32_0 : i32, i32
  }
  func.func @transform_6(%arg0: i32) -> (i32, i32) {
    %c0_i32 = arith.constant 0 : i32
    %c0_i32_0 = arith.constant 0 : i32
    %c0_i32_1 = arith.constant 0 : i32
    return %c0_i32, %c0_i32_0 : i32, i32
  }
  func.func @transform_7(%arg0: i32) -> (i32, i32) {
    %c0_i32 = arith.constant 0 : i32
    %c0_i32_0 = arith.constant 0 : i32
    %c0_i32_1 = arith.constant 0 : i32
    return %c0_i32, %c0_i32_0 : i32, i32
  }
  func.func @transform_8(%arg0: i32) -> (i32, i32) {
    %c0_i32 = arith.constant 0 : i32
    %c0_i32_0 = arith.constant 0 : i32
    %c0_i32_1 = arith.constant 0 : i32
    return %c0_i32, %c0_i32_0 : i32, i32
  }
  func.func @transform_9(%arg0: i32) -> (i32, i32) {
    %c0_i32 = arith.constant 0 : i32
    %c0_i32_0 = arith.constant 0 : i32
    return %arg0, %c0_i32 : i32, i32
  }
}

module attributes {stable_mosaic.version = 11 : i64} {
  func.func @_fused_mlp_kernel(%arg0: i32, %arg1: memref<8x128xbf16, #tpu.memory_space<vmem>>, %arg2: memref<128x128xbf16, #tpu.memory_space<vmem>>, %arg3: memref<1x128xf32, #tpu.memory_space<vmem>>, %arg4: memref<128x128xbf16, #tpu.memory_space<vmem>>, %arg5: memref<1x128xf32, #tpu.memory_space<vmem>>, %arg6: memref<128x128xbf16, #tpu.memory_space<vmem>>, %arg7: memref<1x128xf32, #tpu.memory_space<vmem>>, %arg8: memref<128x128xbf16, #tpu.memory_space<vmem>>, %arg9: memref<1x128xf32, #tpu.memory_space<vmem>>, %arg10: memref<8x128xf32, #tpu.memory_space<vmem>>) attributes {dimension_semantics = [#tpu.dimension_semantics<parallel>], iteration_bounds = array<i64: 1>, scalar_prefetch = 0 : i64, scratch_operands = 0 : i64, tpu.core_type = #tpu.core_type<tc>, window_params = [{transform_indices = @transform_0, window_bounds = array<i64: 8, 128>}, {pipeline_mode = #tpu.pipeline_mode<synchronous>, transform_indices = @transform_1, window_bounds = array<i64: 128, 128>}, {pipeline_mode = #tpu.pipeline_mode<synchronous>, transform_indices = @transform_2, window_bounds = array<i64: 1, 128>}, {pipeline_mode = #tpu.pipeline_mode<synchronous>, transform_indices = @transform_3, window_bounds = array<i64: 128, 128>}, {pipeline_mode = #tpu.pipeline_mode<synchronous>, transform_indices = @transform_4, window_bounds = array<i64: 1, 128>}, {pipeline_mode = #tpu.pipeline_mode<synchronous>, transform_indices = @transform_5, window_bounds = array<i64: 128, 128>}, {pipeline_mode = #tpu.pipeline_mode<synchronous>, transform_indices = @transform_6, window_bounds = array<i64: 1, 128>}, {pipeline_mode = #tpu.pipeline_mode<synchronous>, transform_indices = @transform_7, window_bounds = array<i64: 128, 128>}, {pipeline_mode = #tpu.pipeline_mode<synchronous>, transform_indices = @transform_8, window_bounds = array<i64: 1, 128>}, {transform_indices = @transform_9, window_bounds = array<i64: 8, 128>}]} {
    %c0 = arith.constant 0 : index
    %c0_0 = arith.constant 0 : index
    %0 = vector.load %arg1[%c0, %c0_0] : memref<8x128xbf16, #tpu.memory_space<vmem>>, vector<8x128xbf16>
    %c0_1 = arith.constant 0 : index
    %c0_2 = arith.constant 0 : index
    %1 = vector.load %arg2[%c0_1, %c0_2] : memref<128x128xbf16, #tpu.memory_space<vmem>>, vector<128x128xbf16>
    %c0_3 = arith.constant 0 : index
    %c0_4 = arith.constant 0 : index
    %2 = vector.load %arg3[%c0_3, %c0_4] : memref<1x128xf32, #tpu.memory_space<vmem>>, vector<1x128xf32>
    %cst = arith.constant dense<0.000000e+00> : vector<8x128xf32>
    %3 = tpu.matmul %0, %1, %cst {dimension_numbers = #tpu.dot_dimension_numbers<[1], [0], [0], [1], [0, 0, 1, 1], [], []>} : vector<8x128xbf16>, vector<128x128xbf16>, vector<8x128xf32> -> vector<8x128xf32>
    %4 = vector.broadcast %2 : vector<1x128xf32> to vector<8x128xf32>
    %5 = arith.addf %3, %4 : vector<8x128xf32>
    %6 = arith.negf %5 : vector<8x128xf32>
    %7 = math.exp %6 : vector<8x128xf32>
    %cst_5 = arith.constant 1.000000e+00 : f32
    %8 = vector.broadcast %cst_5 : f32 to vector<8x128xf32>
    %9 = arith.addf %8, %7 : vector<8x128xf32>
    %10 = arith.divf %8, %9 : vector<8x128xf32>
    %11 = arith.mulf %5, %10 : vector<8x128xf32>
    %c0_6 = arith.constant 0 : index
    %c0_7 = arith.constant 0 : index
    %12 = vector.load %arg4[%c0_6, %c0_7] : memref<128x128xbf16, #tpu.memory_space<vmem>>, vector<128x128xbf16>
    %c0_8 = arith.constant 0 : index
    %c0_9 = arith.constant 0 : index
    %13 = vector.load %arg5[%c0_8, %c0_9] : memref<1x128xf32, #tpu.memory_space<vmem>>, vector<1x128xf32>
    %14 = arith.truncf %11 : vector<8x128xf32> to vector<8x128xbf16>
    %cst_10 = arith.constant dense<0.000000e+00> : vector<8x128xf32>
    %15 = tpu.matmul %14, %12, %cst_10 {dimension_numbers = #tpu.dot_dimension_numbers<[1], [0], [0], [1], [0, 0, 1, 1], [], []>} : vector<8x128xbf16>, vector<128x128xbf16>, vector<8x128xf32> -> vector<8x128xf32>
    %16 = vector.broadcast %13 : vector<1x128xf32> to vector<8x128xf32>
    %17 = arith.addf %15, %16 : vector<8x128xf32>
    %18 = arith.negf %17 : vector<8x128xf32>
    %19 = math.exp %18 : vector<8x128xf32>
    %cst_11 = arith.constant 1.000000e+00 : f32
    %20 = vector.broadcast %cst_11 : f32 to vector<8x128xf32>
    %21 = arith.addf %20, %19 : vector<8x128xf32>
    %22 = arith.divf %20, %21 : vector<8x128xf32>
    %23 = arith.mulf %17, %22 : vector<8x128xf32>
    %c0_12 = arith.constant 0 : index
    %c0_13 = arith.constant 0 : index
    %24 = vector.load %arg6[%c0_12, %c0_13] : memref<128x128xbf16, #tpu.memory_space<vmem>>, vector<128x128xbf16>
    %c0_14 = arith.constant 0 : index
    %c0_15 = arith.constant 0 : index
    %25 = vector.load %arg7[%c0_14, %c0_15] : memref<1x128xf32, #tpu.memory_space<vmem>>, vector<1x128xf32>
    %26 = arith.truncf %23 : vector<8x128xf32> to vector<8x128xbf16>
    %cst_16 = arith.constant dense<0.000000e+00> : vector<8x128xf32>
    %27 = tpu.matmul %26, %24, %cst_16 {dimension_numbers = #tpu.dot_dimension_numbers<[1], [0], [0], [1], [0, 0, 1, 1], [], []>} : vector<8x128xbf16>, vector<128x128xbf16>, vector<8x128xf32> -> vector<8x128xf32>
    %28 = vector.broadcast %25 : vector<1x128xf32> to vector<8x128xf32>
    %29 = arith.addf %27, %28 : vector<8x128xf32>
    %30 = arith.negf %29 : vector<8x128xf32>
    %31 = math.exp %30 : vector<8x128xf32>
    %cst_17 = arith.constant 1.000000e+00 : f32
    %32 = vector.broadcast %cst_17 : f32 to vector<8x128xf32>
    %33 = arith.addf %32, %31 : vector<8x128xf32>
    %34 = arith.divf %32, %33 : vector<8x128xf32>
    %35 = arith.mulf %29, %34 : vector<8x128xf32>
    %c0_18 = arith.constant 0 : index
    %c0_19 = arith.constant 0 : index
    %36 = vector.load %arg8[%c0_18, %c0_19] : memref<128x128xbf16, #tpu.memory_space<vmem>>, vector<128x128xbf16>
    %c0_20 = arith.constant 0 : index
    %c0_21 = arith.constant 0 : index
    %37 = vector.load %arg9[%c0_20, %c0_21] : memref<1x128xf32, #tpu.memory_space<vmem>>, vector<1x128xf32>
    %38 = arith.truncf %35 : vector<8x128xf32> to vector<8x128xbf16>
    %cst_22 = arith.constant dense<0.000000e+00> : vector<8x128xf32>
    %39 = tpu.matmul %38, %36, %cst_22 {dimension_numbers = #tpu.dot_dimension_numbers<[1], [0], [0], [1], [0, 0, 1, 1], [], []>} : vector<8x128xbf16>, vector<128x128xbf16>, vector<8x128xf32> -> vector<8x128xf32>
    %40 = vector.broadcast %37 : vector<1x128xf32> to vector<8x128xf32>
    %41 = arith.addf %39, %40 : vector<8x128xf32>
    %c0_23 = arith.constant 0 : index
    %c0_24 = arith.constant 0 : index
    %42 = vector.load %arg10[%c0_23, %c0_24] : memref<8x128xf32, #tpu.memory_space<vmem>>, vector<8x128xf32>
    tpu.vector_store %arg10[%c0_23, %c0_24], %41 {strides = array<i32>} : memref<8x128xf32, #tpu.memory_space<vmem>>, vector<8x128xf32>,
    return
  }
  func.func @transform_0(%arg0: i32) -> (i32, i32) {
    %c0_i32 = arith.constant 0 : i32
    %c0_i32_0 = arith.constant 0 : i32
    return %arg0, %c0_i32 : i32, i32
  }
  func.func @transform_1(%arg0: i32) -> (i32, i32) {
    %c0_i32 = arith.constant 0 : i32
    %c0_i32_0 = arith.constant 0 : i32
    %c0_i32_1 = arith.constant 0 : i32
    return %c0_i32, %c0_i32_0 : i32, i32
  }
  func.func @transform_2(%arg0: i32) -> (i32, i32) {
    %c0_i32 = arith.constant 0 : i32
    %c0_i32_0 = arith.constant 0 : i32
    %c0_i32_1 = arith.constant 0 : i32
    return %c0_i32, %c0_i32_0 : i32, i32
  }
  func.func @transform_3(%arg0: i32) -> (i32, i32) {
    %c0_i32 = arith.constant 0 : i32
    %c0_i32_0 = arith.constant 0 : i32
    %c0_i32_1 = arith.constant 0 : i32
    return %c0_i32, %c0_i32_0 : i32, i32
  }
  func.func @transform_4(%arg0: i32) -> (i32, i32) {
    %c0_i32 = arith.constant 0 : i32
    %c0_i32_0 = arith.constant 0 : i32
    %c0_i32_1 = arith.constant 0 : i32
    return %c0_i32, %c0_i32_0 : i32, i32
  }
  func.func @transform_5(%arg0: i32) -> (i32, i32) {
    %c0_i32 = arith.constant 0 : i32
    %c0_i32_0 = arith.constant 0 : i32
    %c0_i32_1 = arith.constant 0 : i32
    return %c0_i32, %c0_i32_0 : i32, i32
  }
  func.func @transform_6(%arg0: i32) -> (i32, i32) {
    %c0_i32 = arith.constant 0 : i32
    %c0_i32_0 = arith.constant 0 : i32
    %c0_i32_1 = arith.constant 0 : i32
    return %c0_i32, %c0_i32_0 : i32, i32
  }
  func.func @transform_7(%arg0: i32) -> (i32, i32) {
    %c0_i32 = arith.constant 0 : i32
    %c0_i32_0 = arith.constant 0 : i32
    %c0_i32_1 = arith.constant 0 : i32
    return %c0_i32, %c0_i32_0 : i32, i32
  }
  func.func @transform_8(%arg0: i32) -> (i32, i32) {
    %c0_i32 = arith.constant 0 : i32
    %c0_i32_0 = arith.constant 0 : i32
    %c0_i32_1 = arith.constant 0 : i32
    return %c0_i32, %c0_i32_0 : i32, i32
  }
  func.func @transform_9(%arg0: i32) -> (i32, i32) {
    %c0_i32 = arith.constant 0 : i32
    %c0_i32_0 = arith.constant 0 : i32
    return %arg0, %c0_i32 : i32, i32
  }
}

</mosaic_0001>

<llo_original>
// kernel: tpu_custom_call.1
$region0: #{tpu_custom_call.1}
  #allocation0 [shape = 'u32[]', space=smem, size = 0x4, offset = 0x4, fixed_abs, tag = 'smem constant byte address 0x4 - core index']
  #allocation1 [shape = 'u32[144,128]{1,0:T(1,128)}', space=vmem, size = 0x12000, scoped, tag = 'internal scratch']
  %s0 = inlined_call_operand.hbm [shape: bf16[8,128], index: 0, kind: input, shape index: {}]
  %s1 = inlined_call_operand.hbm [shape: bf16[128,128], index: 1, kind: input, shape index: {}]
  %s2 = inlined_call_operand.vmem [shape: f32[1,128], index: 2, kind: input, shape index: {}]
  %s3 = inlined_call_operand.hbm [shape: bf16[128,128], index: 3, kind: input, shape index: {}]
  %s4 = inlined_call_operand.vmem [shape: f32[1,128], index: 4, kind: input, shape index: {}]
  %s5 = inlined_call_operand.hbm [shape: bf16[128,128], index: 5, kind: input, shape index: {}]
  %s6 = inlined_call_operand.vmem [shape: f32[1,128], index: 6, kind: input, shape index: {}]
  %s7 = inlined_call_operand.hbm [shape: bf16[128,128], index: 7, kind: input, shape index: {}]
  %s8 = inlined_call_operand.vmem [shape: f32[1,128], index: 8, kind: input, shape index: {}]
  %s9 = inlined_call_operand.hbm [shape: f32[8,128], index: 9, kind: output, shape index: {}]
  %s10 = sld [smem:[#allocation0]]
  $region66: #{tpu_custom_call.1} parent=0
    _
  %s12 = ssub.s32 1, %s10
  %s13 = scalar_select 0, %s12, %s10
  $region1: #{tpu_custom_call.1} parent=0
    #allocation2 [shape = 'u8[2048]{0}', space=vmem, size = 0x800, scoped, tag = 'input window, operand 0, single buffered']
    #allocation3 [shape = 's32[1]{0}', space=sflag, size = 0x4, scoped, tag = 'scoped memory for tpu_custom_call.1']
    #allocation4 [shape = 's32[1]{0}', space=sflag, size = 0x4, scoped, tag = 'scoped memory for tpu_custom_call.1']
    #allocation5 [shape = 'u8[32768]{0}', space=vmem, size = 0x8000, scoped, tag = 'input window, operand 1, single buffered']
    #allocation6 [shape = 's32[1]{0}', space=sflag, size = 0x4, scoped, tag = 'scoped memory for tpu_custom_call.1']
    #allocation7 [shape = 'u8[32768]{0}', space=vmem, size = 0x8000, scoped, tag = 'input window, operand 3, single buffered']
    #allocation8 [shape = 'u8[32768]{0}', space=vmem, size = 0x8000, scoped, tag = 'input window, operand 5, single buffered']
    #allocation9 [shape = 's32[1]{0}', space=sflag, size = 0x4, scoped, tag = 'scoped memory for tpu_custom_call.1']
    #allocation10 [shape = 'u8[32768]{0}', space=vmem, size = 0x8000, scoped, tag = 'input window, operand 7, single buffered']
    #allocation11 [shape = 'u8[4096]{0}', space=vmem, size = 0x1000, scoped, tag = 'output window, operand 0, single buffered']
    %14 = vsyncpa [#allocation3], 0
    %15 = vsyncpa [#allocation6], 0
    %16 = vsyncpa [#allocation9], 0
    %17 = vsyncpa [#allocation4], 0
    // Predicated region
    $region2: #{tpu_custom_call.1} parent=1 // pred_check
      _
    $region3: #{tpu_custom_call.1} parent=1 // pred_check_branch
      %19 = sbr.rel (0) target = $region5
    $region4: #{tpu_custom_call.1} parent=1 // pred_region
      %s21 = ssub.s32 64, 64
      %22 = vsyncadd [#allocation3], %s21
      %s24 = sshll.u32 [#allocation2], 4
      %s25 = int_to_ptr.vmem [resolvable:$true] %s24
      %27 = dma.hbm_to_vmem [thread:$0]  %s0, 64, %s25, [#allocation3]
    $region5: #{tpu_custom_call.1} parent=1 // pred_fallthru
      _
    // Predicated region
    $region6: #{tpu_custom_call.1} parent=1 // pred_check
      _
    $region7: #{tpu_custom_call.1} parent=1 // pred_check_branch
      %29 = sbr.rel (0) target = $region9
    $region8: #{tpu_custom_call.1} parent=1 // pred_region
      %s31 = ssub.s32 1024, 1024
      %32 = vsyncadd [#allocation6], %s31
      %s33 = sshll.u32 [#allocation5], 4
      %s34 = int_to_ptr.vmem [resolvable:$true] %s33
      %39 = dma.hbm_to_vmem [thread:$0]  %s1, 1024, %s34, [#allocation6], 64, 64, 4
    $region9: #{tpu_custom_call.1} parent=1 // pred_fallthru
      _
    // Predicated region
    $region10: #{tpu_custom_call.1} parent=1 // pred_check
      _
    $region11: #{tpu_custom_call.1} parent=1 // pred_check_branch
      %41 = sbr.rel (0) target = $region13
    $region12: #{tpu_custom_call.1} parent=1 // pred_region
      _
    $region13: #{tpu_custom_call.1} parent=1 // pred_fallthru
      _
    // Predicated region
    $region14: #{tpu_custom_call.1} parent=1 // pred_check
      _
    $region15: #{tpu_custom_call.1} parent=1 // pred_check_branch
      %43 = sbr.rel (0) target = $region17
    $region16: #{tpu_custom_call.1} parent=1 // pred_region
      %s45 = ssub.s32 1024, 1024
      %46 = vsyncadd [#allocation6], %s45
      %s47 = sshll.u32 [#allocation7], 4
      %s48 = int_to_ptr.vmem [resolvable:$true] %s47
      %53 = dma.hbm_to_vmem [thread:$0]  %s3, 1024, %s48, [#allocation6], 64, 64, 4
    $region17: #{tpu_custom_call.1} parent=1 // pred_fallthru
      _
    // Predicated region
    $region18: #{tpu_custom_call.1} parent=1 // pred_check
      _
    $region19: #{tpu_custom_call.1} parent=1 // pred_check_branch
      %55 = sbr.rel (0) target = $region21
    $region20: #{tpu_custom_call.1} parent=1 // pred_region
      _
    $region21: #{tpu_custom_call.1} parent=1 // pred_fallthru
      _
    // Predicated region
    $region22: #{tpu_custom_call.1} parent=1 // pred_check
      _
    $region23: #{tpu_custom_call.1} parent=1 // pred_check_branch
      %57 = sbr.rel (0) target = $region25
    $region24: #{tpu_custom_call.1} parent=1 // pred_region
      %s59 = ssub.s32 1024, 1024
      %60 = vsyncadd [#allocation9], %s59
      %s61 = sshll.u32 [#allocation8], 4
      %s62 = int_to_ptr.vmem [resolvable:$true] %s61
      %67 = dma.hbm_to_vmem [thread:$0]  %s5, 1024, %s62, [#allocation9], 64, 64, 4
    $region25: #{tpu_custom_call.1} parent=1 // pred_fallthru
      _
    // Predicated region
    $region26: #{tpu_custom_call.1} parent=1 // pred_check
      _
    $region27: #{tpu_custom_call.1} parent=1 // pred_check_branch
      %69 = sbr.rel (0) target = $region29
    $region28: #{tpu_custom_call.1} parent=1 // pred_region
      _
    $region29: #{tpu_custom_call.1} parent=1 // pred_fallthru
      _
    // Predicated region
    $region30: #{tpu_custom_call.1} parent=1 // pred_check
      _
    $region31: #{tpu_custom_call.1} parent=1 // pred_check_branch
      %71 = sbr.rel (0) target = $region33
    $region32: #{tpu_custom_call.1} parent=1 // pred_region
      %s73 = ssub.s32 1024, 1024
      %74 = vsyncadd [#allocation9], %s73
      %s75 = sshll.u32 [#allocation10], 4
      %s76 = int_to_ptr.vmem [resolvable:$true] %s75
      %81 = dma.hbm_to_vmem [thread:$0]  %s7, 1024, %s76, [#allocation9], 64, 64, 4
    $region33: #{tpu_custom_call.1} parent=1 // pred_fallthru
      _
    // Predicated region
    $region34: #{tpu_custom_call.1} parent=1 // pred_check
      _
    $region35: #{tpu_custom_call.1} parent=1 // pred_check_branch
      %83 = sbr.rel (0) target = $region37
    $region36: #{tpu_custom_call.1} parent=1 // pred_region
      _
    $region37: #{tpu_custom_call.1} parent=1 // pred_fallthru
      _
    // Predicated region
    $region38: #{tpu_custom_call.1} parent=1 // pred_check
      _
    $region39: #{tpu_custom_call.1} parent=1 // pred_check_branch
      %85 = sbr.rel (0) target = $region41
    $region40: #{tpu_custom_call.1} parent=1 // pred_region
      %86 = dma.done [#allocation3], 64
    $region41: #{tpu_custom_call.1} parent=1 // pred_fallthru
      _
    // Predicated region
    $region42: #{tpu_custom_call.1} parent=1 // pred_check
      _
    $region43: #{tpu_custom_call.1} parent=1 // pred_check_branch
      %88 = sbr.rel (0) target = $region45
    $region44: #{tpu_custom_call.1} parent=1 // pred_region
      %89 = dma.done [#allocation6], 1024
    $region45: #{tpu_custom_call.1} parent=1 // pred_fallthru
      _
    // Predicated region
    $region46: #{tpu_custom_call.1} parent=1 // pred_check
      _
    $region47: #{tpu_custom_call.1} parent=1 // pred_check_branch
      %91 = sbr.rel (0) target = $region49
    $region48: #{tpu_custom_call.1} parent=1 // pred_region
      %92 = dma.done [#allocation6], 1024
    $region49: #{tpu_custom_call.1} parent=1 // pred_fallthru
      _
    // Predicated region
    $region50: #{tpu_custom_call.1} parent=1 // pred_check
      _
    $region51: #{tpu_custom_call.1} parent=1 // pred_check_branch
      %94 = sbr.rel (0) target = $region53
    $region52: #{tpu_custom_call.1} parent=1 // pred_region
      %95 = dma.done [#allocation9], 1024
    $region53: #{tpu_custom_call.1} parent=1 // pred_fallthru
      _
    // Predicated region
    $region54: #{tpu_custom_call.1} parent=1 // pred_check
      _
    $region55: #{tpu_custom_call.1} parent=1 // pred_check_branch
      %97 = sbr.rel (0) target = $region57
    $region56: #{tpu_custom_call.1} parent=1 // pred_region
      %98 = dma.done [#allocation9], 1024
    $region57: #{tpu_custom_call.1} parent=1 // pred_fallthru
      _
    %v100 = vld [vmem:[#allocation2] sm:$0xf]
    %v101 = vld [vmem:[#allocation5] sm:$0xf]
    %v102 = vld [vmem:[#allocation5 + $0x4] sm:$0xf]
    %v103 = vld [vmem:[#allocation5 + $0x8] sm:$0xf]
    %v104 = vld [vmem:[#allocation5 + $0xc] sm:$0xf]
    %v105 = vld [vmem:[#allocation5 + $0x10] sm:$0xf]
    %v106 = vld [vmem:[#allocation5 + $0x14] sm:$0xf]
    %v107 = vld [vmem:[#allocation5 + $0x18] sm:$0xf]
    %v108 = vld [vmem:[#allocation5 + $0x1c] sm:$0xf]
    %v109 = vld [vmem:[#allocation5 + $0x20] sm:$0xf]
    %v110 = vld [vmem:[#allocation5 + $0x24] sm:$0xf]
    %v111 = vld [vmem:[#allocation5 + $0x28] sm:$0xf]
    %v112 = vld [vmem:[#allocation5 + $0x2c] sm:$0xf]
    %v113 = vld [vmem:[#allocation5 + $0x30] sm:$0xf]
    %v114 = vld [vmem:[#allocation5 + $0x34] sm:$0xf]
    %v115 = vld [vmem:[#allocation5 + $0x38] sm:$0xf]
    %v116 = vld [vmem:[#allocation5 + $0x3c] sm:$0xf]
    %v117 = vld [vmem:[%s2] sm:$0x1]
    %v119 = vlaneseq
    %v120 = vshrl.u32 %v119, 7
    %v121 = vsub.s32 0, %v120
    %v122 = vrot.slane %v117, %v121
    %v140 = vunpack.c.l.b16 %v101
    %v141 = vunpack.c.l.b16 %v102
    %v142 = vunpack.c.l.b16 %v103
    %v143 = vunpack.c.l.b16 %v104
    %v144 = vunpack.c.l.b16 %v105
    %v145 = vunpack.c.l.b16 %v106
    %v146 = vunpack.c.l.b16 %v107
    %v147 = vunpack.c.l.b16 %v108
    %v148 = vunpack.c.l.b16 %v109
    %v149 = vunpack.c.l.b16 %v110
    %v150 = vunpack.c.l.b16 %v111
    %v151 = vunpack.c.l.b16 %v112
    %v152 = vunpack.c.l.b16 %v113
    %v153 = vunpack.c.l.b16 %v114
    %v154 = vunpack.c.l.b16 %v115
    %v155 = vunpack.c.l.b16 %v116
    %v156 = vpack.c.b16 %v141, %v140
    %v157 = vpack.c.b16 %v143, %v142
    %v158 = vpack.c.b16 %v145, %v144
    %v159 = vpack.c.b16 %v147, %v146
    %v160 = vpack.c.b16 %v149, %v148
    %v161 = vpack.c.b16 %v151, %v150
    %v162 = vpack.c.b16 %v153, %v152
    %v163 = vpack.c.b16 %v155, %v154
    %172 = vmatprep.subr.bf16.mxu0 0
    %173 = vmatpush1.bf16.msra.mxu0 %v156
    %174 = vmatprep.subr.bf16.mxu0 0
    %175 = vmatpush1.bf16.msra.mxu0 %v157
    %176 = vmatprep.subr.bf16.mxu0 0
    %177 = vmatpush1.bf16.msra.mxu0 %v158
    %178 = vmatprep.subr.bf16.mxu0 0
    %179 = vmatpush1.bf16.msra.mxu0 %v159
    %180 = vmatprep.subr.bf16.mxu0 0
    %181 = vmatpush1.bf16.msra.mxu0 %v160
    %182 = vmatprep.subr.bf16.mxu0 0
    %183 = vmatpush1.bf16.msra.mxu0 %v161
    %184 = vmatprep.subr.bf16.mxu0 0
    %185 = vmatpush1.bf16.msra.mxu0 %v162
    %186 = vmatprep.subr.bf16.mxu0 0
    %187 = vmatpush1.bf16.msra.mxu0 %v163
    %188 = vmatprep.subr.bf16.mxu0 0
    %189 = vmatpush1.bf16.msra.mxu0 0
    %190 = vmatprep.subr.bf16.mxu0 0
    %191 = vmatpush1.bf16.msra.mxu0 0
    %192 = vmatprep.subr.bf16.mxu0 0
    %193 = vmatpush1.bf16.msra.mxu0 0
    %194 = vmatprep.subr.bf16.mxu0 0
    %195 = vmatpush1.bf16.msra.mxu0 0
    %196 = vmatprep.subr.bf16.mxu0 0
    %197 = vmatpush1.bf16.msra.mxu0 0
    %198 = vmatprep.subr.bf16.mxu0 0
    %199 = vmatpush1.bf16.msra.mxu0 0
    %200 = vmatprep.subr.bf16.mxu0 0
    %201 = vmatpush1.bf16.msra.mxu0 0
    %202 = vmatprep.subr.bf16.mxu0 0
    %203 = vmatpush1.bf16.msra.mxu0 0
    %204 = vmatprep.mubr.bf16.mxu0 0
    %205 = vmatmul.mubr.bf16.gmra.mrb[0].mxu0 %v100
    %v206 = vpop.f32.mrb[0].mxu0
    %v207 = vadd.f32 %v122, %v206
    %v208 = vpop.f32.mrb[0].mxu0
    %v209 = vpop.f32.mrb[0].mxu0
    %v210 = vpop.f32.mrb[0].mxu0
    %211 = vdwg.mxu0
    %v212 = vxor.u32 %v207, 2147483648
    %v213 = vmul.f32 %v212, 1.442695
    %v214 = vpow.pop %v213
    %v215 = vadd.f32 %v214, 1.0
    %v216 = vrcp.pop %v215
    %v217 = vmul.f32 1.0, %v216
    %v218 = vmul.f32 %v207, %v217
    %v219 = vld [vmem:[#allocation7] sm:$0xf]
    %v220 = vld [vmem:[#allocation7 + $0x4] sm:$0xf]
    %v221 = vld [vmem:[#allocation7 + $0x8] sm:$0xf]
    %v222 = vld [vmem:[#allocation7 + $0xc] sm:$0xf]
    %v223 = vld [vmem:[#allocation7 + $0x10] sm:$0xf]
    %v224 = vld [vmem:[#allocation7 + $0x14] sm:$0xf]
    %v225 = vld [vmem:[#allocation7 + $0x18] sm:$0xf]
    %v226 = vld [vmem:[#allocation7 + $0x1c] sm:$0xf]
    %v227 = vld [vmem:[#allocation7 + $0x20] sm:$0xf]
    %v228 = vld [vmem:[#allocation7 + $0x24] sm:$0xf]
    %v229 = vld [vmem:[#allocation7 + $0x28] sm:$0xf]
    %v230 = vld [vmem:[#allocation7 + $0x2c] sm:$0xf]
    %v231 = vld [vmem:[#allocation7 + $0x30] sm:$0xf]
    %v232 = vld [vmem:[#allocation7 + $0x34] sm:$0xf]
    %v233 = vld [vmem:[#allocation7 + $0x38] sm:$0xf]
    %v234 = vld [vmem:[#allocation7 + $0x3c] sm:$0xf]
    %v235 = vld [vmem:[%s4] sm:$0x1]
    %v236 = vpack.c.bf16 %v218, %v218
    %v238 = vlaneseq
    %v239 = vshrl.u32 %v238, 7
    %v240 = vsub.s32 0, %v239
    %v241 = vrot.slane %v235, %v240
    %v259 = vunpack.c.l.b16 %v219
    %v260 = vunpack.c.l.b16 %v220
    %v261 = vunpack.c.l.b16 %v221
    %v262 = vunpack.c.l.b16 %v222
    %v263 = vunpack.c.l.b16 %v223
    %v264 = vunpack.c.l.b16 %v224
    %v265 = vunpack.c.l.b16 %v225
    %v266 = vunpack.c.l.b16 %v226
    %v267 = vunpack.c.l.b16 %v227
    %v268 = vunpack.c.l.b16 %v228
    %v269 = vunpack.c.l.b16 %v229
    %v270 = vunpack.c.l.b16 %v230
    %v271 = vunpack.c.l.b16 %v231
    %v272 = vunpack.c.l.b16 %v232
    %v273 = vunpack.c.l.b16 %v233
    %v274 = vunpack.c.l.b16 %v234
    %v275 = vpack.c.b16 %v260, %v259
    %v276 = vpack.c.b16 %v262, %v261
    %v277 = vpack.c.b16 %v264, %v263
    %v278 = vpack.c.b16 %v266, %v265
    %v279 = vpack.c.b16 %v268, %v267
    %v280 = vpack.c.b16 %v270, %v269
    %v281 = vpack.c.b16 %v272, %v271
    %v282 = vpack.c.b16 %v274, %v273
    %291 = vmatprep.subr.bf16.mxu0 0
    %292 = vmatpush1.bf16.msra.mxu0 %v275
    %293 = vmatprep.subr.bf16.mxu0 0
    %294 = vmatpush1.bf16.msra.mxu0 %v276
    %295 = vmatprep.subr.bf16.mxu0 0
    %296 = vmatpush1.bf16.msra.mxu0 %v277
    %297 = vmatprep.subr.bf16.mxu0 0
    %298 = vmatpush1.bf16.msra.mxu0 %v278
    %299 = vmatprep.subr.bf16.mxu0 0
    %300 = vmatpush1.bf16.msra.mxu0 %v279
    %301 = vmatprep.subr.bf16.mxu0 0
    %302 = vmatpush1.bf16.msra.mxu0 %v280
    %303 = vmatprep.subr.bf16.mxu0 0
    %304 = vmatpush1.bf16.msra.mxu0 %v281
    %305 = vmatprep.subr.bf16.mxu0 0
    %306 = vmatpush1.bf16.msra.mxu0 %v282
    %307 = vmatprep.subr.bf16.mxu0 0
    %308 = vmatpush1.bf16.msra.mxu0 0
    %309 = vmatprep.subr.bf16.mxu0 0
    %310 = vmatpush1.bf16.msra.mxu0 0
    %311 = vmatprep.subr.bf16.mxu0 0
    %312 = vmatpush1.bf16.msra.mxu0 0
    %313 = vmatprep.subr.bf16.mxu0 0
    %314 = vmatpush1.bf16.msra.mxu0 0
    %315 = vmatprep.subr.bf16.mxu0 0
    %316 = vmatpush1.bf16.msra.mxu0 0
    %317 = vmatprep.subr.bf16.mxu0 0
    %318 = vmatpush1.bf16.msra.mxu0 0
    %319 = vmatprep.subr.bf16.mxu0 0
    %320 = vmatpush1.bf16.msra.mxu0 0
    %321 = vmatprep.subr.bf16.mxu0 0
    %322 = vmatpush1.bf16.msra.mxu0 0
    %323 = vmatprep.mubr.bf16.mxu0 0
    %324 = vmatmul.mubr.bf16.gmra.mrb[0].mxu0 %v236
    %v325 = vpop.f32.mrb[0].mxu0
    %v326 = vadd.f32 %v241, %v325
    %v327 = vpop.f32.mrb[0].mxu0
    %v328 = vpop.f32.mrb[0].mxu0
    %v329 = vpop.f32.mrb[0].mxu0
    %330 = vdwg.mxu0
    %v331 = vxor.u32 %v326, 2147483648
    %v332 = vmul.f32 %v331, 1.442695
    %v333 = vpow.pop %v332
    %v334 = vadd.f32 %v333, 1.0
    %v335 = vrcp.pop %v334
    %v336 = vmul.f32 1.0, %v335
    %v337 = vmul.f32 %v326, %v336
    %v338 = vld [vmem:[#allocation8] sm:$0xf]
    %v339 = vld [vmem:[#allocation8 + $0x4] sm:$0xf]
    %v340 = vld [vmem:[#allocation8 + $0x8] sm:$0xf]
    %v341 = vld [vmem:[#allocation8 + $0xc] sm:$0xf]
    %v342 = vld [vmem:[#allocation8 + $0x10] sm:$0xf]
    %v343 = vld [vmem:[#allocation8 + $0x14] sm:$0xf]
    %v344 = vld [vmem:[#allocation8 + $0x18] sm:$0xf]
    %v345 = vld [vmem:[#allocation8 + $0x1c] sm:$0xf]
    %v346 = vld [vmem:[#allocation8 + $0x20] sm:$0xf]
    %v347 = vld [vmem:[#allocation8 + $0x24] sm:$0xf]
    %v348 = vld [vmem:[#allocation8 + $0x28] sm:$0xf]
    %v349 = vld [vmem:[#allocation8 + $0x2c] sm:$0xf]
    %v350 = vld [vmem:[#allocation8 + $0x30] sm:$0xf]
    %v351 = vld [vmem:[#allocation8 + $0x34] sm:$0xf]
    %v352 = vld [vmem:[#allocation8 + $0x38] sm:$0xf]
    %v353 = vld [vmem:[#allocation8 + $0x3c] sm:$0xf]
    %v354 = vld [vmem:[%s6] sm:$0x1]
    %v355 = vpack.c.bf16 %v337, %v337
    %v357 = vlaneseq
    %v358 = vshrl.u32 %v357, 7
    %v359 = vsub.s32 0, %v358
    %v360 = vrot.slane %v354, %v359
    %v378 = vunpack.c.l.b16 %v338
    %v379 = vunpack.c.l.b16 %v339
    %v380 = vunpack.c.l.b16 %v340
    %v381 = vunpack.c.l.b16 %v341
    %v382 = vunpack.c.l.b16 %v342
    %v383 = vunpack.c.l.b16 %v343
    %v384 = vunpack.c.l.b16 %v344
    %v385 = vunpack.c.l.b16 %v345
    %v386 = vunpack.c.l.b16 %v346
    %v387 = vunpack.c.l.b16 %v347
    %v388 = vunpack.c.l.b16 %v348
    %v389 = vunpack.c.l.b16 %v349
    %v390 = vunpack.c.l.b16 %v350
    %v391 = vunpack.c.l.b16 %v351
    %v392 = vunpack.c.l.b16 %v352
    %v393 = vunpack.c.l.b16 %v353
    %v394 = vpack.c.b16 %v379, %v378
    %v395 = vpack.c.b16 %v381, %v380
    %v396 = vpack.c.b16 %v383, %v382
    %v397 = vpack.c.b16 %v385, %v384
    %v398 = vpack.c.b16 %v387, %v386
    %v399 = vpack.c.b16 %v389, %v388
    %v400 = vpack.c.b16 %v391, %v390
    %v401 = vpack.c.b16 %v393, %v392
    %410 = vmatprep.subr.bf16.mxu0 0
    %411 = vmatpush1.bf16.msra.mxu0 %v394
    %412 = vmatprep.subr.bf16.mxu0 0
    %413 = vmatpush1.bf16.msra.mxu0 %v395
    %414 = vmatprep.subr.bf16.mxu0 0
    %415 = vmatpush1.bf16.msra.mxu0 %v396
    %416 = vmatprep.subr.bf16.mxu0 0
    %417 = vmatpush1.bf16.msra.mxu0 %v397
    %418 = vmatprep.subr.bf16.mxu0 0
    %419 = vmatpush1.bf16.msra.mxu0 %v398
    %420 = vmatprep.subr.bf16.mxu0 0
    %421 = vmatpush1.bf16.msra.mxu0 %v399
    %422 = vmatprep.subr.bf16.mxu0 0
    %423 = vmatpush1.bf16.msra.mxu0 %v400
    %424 = vmatprep.subr.bf16.mxu0 0
    %425 = vmatpush1.bf16.msra.mxu0 %v401
    %426 = vmatprep.subr.bf16.mxu0 0
    %427 = vmatpush1.bf16.msra.mxu0 0
    %428 = vmatprep.subr.bf16.mxu0 0
    %429 = vmatpush1.bf16.msra.mxu0 0
    %430 = vmatprep.subr.bf16.mxu0 0
    %431 = vmatpush1.bf16.msra.mxu0 0
    %432 = vmatprep.subr.bf16.mxu0 0
    %433 = vmatpush1.bf16.msra.mxu0 0
    %434 = vmatprep.subr.bf16.mxu0 0
    %435 = vmatpush1.bf16.msra.mxu0 0
    %436 = vmatprep.subr.bf16.mxu0 0
    %437 = vmatpush1.bf16.msra.mxu0 0
    %438 = vmatprep.subr.bf16.mxu0 0
    %439 = vmatpush1.bf16.msra.mxu0 0
    %440 = vmatprep.subr.bf16.mxu0 0
    %441 = vmatpush1.bf16.msra.mxu0 0
    %442 = vmatprep.mubr.bf16.mxu0 0
    %443 = vmatmul.mubr.bf16.gmra.mrb[0].mxu0 %v355
    %v444 = vpop.f32.mrb[0].mxu0
    %v445 = vadd.f32 %v360, %v444
    %v446 = vpop.f32.mrb[0].mxu0
    %v447 = vpop.f32.mrb[0].mxu0
    %v448 = vpop.f32.mrb[0].mxu0
    %449 = vdwg.mxu0
    %v450 = vxor.u32 %v445, 2147483648
    %v451 = vmul.f32 %v450, 1.442695
    %v452 = vpow.pop %v451
    %v453 = vadd.f32 %v452, 1.0
    %v454 = vrcp.pop %v453
    %v455 = vmul.f32 1.0, %v454
    %v456 = vmul.f32 %v445, %v455
    %v457 = vld [vmem:[#allocation10] sm:$0xf]
    %v458 = vld [vmem:[#allocation10 + $0x4] sm:$0xf]
    %v459 = vld [vmem:[#allocation10 + $0x8] sm:$0xf]
    %v460 = vld [vmem:[#allocation10 + $0xc] sm:$0xf]
    %v461 = vld [vmem:[#allocation10 + $0x10] sm:$0xf]
    %v462 = vld [vmem:[#allocation10 + $0x14] sm:$0xf]
    %v463 = vld [vmem:[#allocation10 + $0x18] sm:$0xf]
    %v464 = vld [vmem:[#allocation10 + $0x1c] sm:$0xf]
    %v465 = vld [vmem:[#allocation10 + $0x20] sm:$0xf]
    %v466 = vld [vmem:[#allocation10 + $0x24] sm:$0xf]
    %v467 = vld [vmem:[#allocation10 + $0x28] sm:$0xf]
    %v468 = vld [vmem:[#allocation10 + $0x2c] sm:$0xf]
    %v469 = vld [vmem:[#allocation10 + $0x30] sm:$0xf]
    %v470 = vld [vmem:[#allocation10 + $0x34] sm:$0xf]
    %v471 = vld [vmem:[#allocation10 + $0x38] sm:$0xf]
    %v472 = vld [vmem:[#allocation10 + $0x3c] sm:$0xf]
    %v473 = vld [vmem:[%s8] sm:$0x1]
    %v474 = vpack.c.bf16 %v456, %v456
    %v476 = vlaneseq
    %v477 = vshrl.u32 %v476, 7
    %v478 = vsub.s32 0, %v477
    %v479 = vrot.slane %v473, %v478
    %v497 = vunpack.c.l.b16 %v457
    %v498 = vunpack.c.l.b16 %v458
    %v499 = vunpack.c.l.b16 %v459
    %v500 = vunpack.c.l.b16 %v460
    %v501 = vunpack.c.l.b16 %v461
    %v502 = vunpack.c.l.b16 %v462
    %v503 = vunpack.c.l.b16 %v463
    %v504 = vunpack.c.l.b16 %v464
    %v505 = vunpack.c.l.b16 %v465
    %v506 = vunpack.c.l.b16 %v466
    %v507 = vunpack.c.l.b16 %v467
    %v508 = vunpack.c.l.b16 %v468
    %v509 = vunpack.c.l.b16 %v469
    %v510 = vunpack.c.l.b16 %v470
    %v511 = vunpack.c.l.b16 %v471
    %v512 = vunpack.c.l.b16 %v472
    %v513 = vpack.c.b16 %v498, %v497
    %v514 = vpack.c.b16 %v500, %v499
    %v515 = vpack.c.b16 %v502, %v501
    %v516 = vpack.c.b16 %v504, %v503
    %v517 = vpack.c.b16 %v506, %v505
    %v518 = vpack.c.b16 %v508, %v507
    %v519 = vpack.c.b16 %v510, %v509
    %v520 = vpack.c.b16 %v512, %v511
    %529 = vmatprep.subr.bf16.mxu0 0
    %530 = vmatpush1.bf16.msra.mxu0 %v513
    %531 = vmatprep.subr.bf16.mxu0 0
    %532 = vmatpush1.bf16.msra.mxu0 %v514
    %533 = vmatprep.subr.bf16.mxu0 0
    %534 = vmatpush1.bf16.msra.mxu0 %v515
    %535 = vmatprep.subr.bf16.mxu0 0
    %536 = vmatpush1.bf16.msra.mxu0 %v516
    %537 = vmatprep.subr.bf16.mxu0 0
    %538 = vmatpush1.bf16.msra.mxu0 %v517
    %539 = vmatprep.subr.bf16.mxu0 0
    %540 = vmatpush1.bf16.msra.mxu0 %v518
    %541 = vmatprep.subr.bf16.mxu0 0
    %542 = vmatpush1.bf16.msra.mxu0 %v519
    %543 = vmatprep.subr.bf16.mxu0 0
    %544 = vmatpush1.bf16.msra.mxu0 %v520
    %545 = vmatprep.subr.bf16.mxu0 0
    %546 = vmatpush1.bf16.msra.mxu0 0
    %547 = vmatprep.subr.bf16.mxu0 0
    %548 = vmatpush1.bf16.msra.mxu0 0
    %549 = vmatprep.subr.bf16.mxu0 0
    %550 = vmatpush1.bf16.msra.mxu0 0
    %551 = vmatprep.subr.bf16.mxu0 0
    %552 = vmatpush1.bf16.msra.mxu0 0
    %553 = vmatprep.subr.bf16.mxu0 0
    %554 = vmatpush1.bf16.msra.mxu0 0
    %555 = vmatprep.subr.bf16.mxu0 0
    %556 = vmatpush1.bf16.msra.mxu0 0
    %557 = vmatprep.subr.bf16.mxu0 0
    %558 = vmatpush1.bf16.msra.mxu0 0
    %559 = vmatprep.subr.bf16.mxu0 0
    %560 = vmatpush1.bf16.msra.mxu0 0
    %561 = vmatprep.mubr.bf16.mxu0 0
    %562 = vmatmul.mubr.bf16.gmra.mrb[0].mxu0 %v474
    %v563 = vpop.f32.mrb[0].mxu0
    %v564 = vadd.f32 %v479, %v563
    %v565 = vpop.f32.mrb[0].mxu0
    %v566 = vpop.f32.mrb[0].mxu0
    %v567 = vpop.f32.mrb[0].mxu0
    %568 = vdwg.mxu0
    %569 = vst [vmem:[#allocation11] sm:$0xff] %v564
    // Predicated region
    $region58: #{tpu_custom_call.1} parent=1 // pred_check
      _
    $region59: #{tpu_custom_call.1} parent=1 // pred_check_branch
      %571 = sbr.rel (0) target = $region61
    $region60: #{tpu_custom_call.1} parent=1 // pred_region
      %s573 = ssub.s32 128, 128
      %574 = vsyncadd [#allocation4], %s573
      %s576 = sshll.u32 [#allocation11], 4
      %s577 = int_to_ptr.vmem [resolvable:$true] %s576
      %579 = dma.vmem_to_hbm [thread:$0]  %s577, 128, %s9, [#allocation4]
    $region61: #{tpu_custom_call.1} parent=1 // pred_fallthru
      _
    // Predicated region
    $region62: #{tpu_custom_call.1} parent=1 // pred_check
      _
    $region63: #{tpu_custom_call.1} parent=1 // pred_check_branch
      %581 = sbr.rel (0) target = $region65
    $region64: #{tpu_custom_call.1} parent=1 // pred_region
      %582 = dma.done [#allocation4], 128
    $region65: #{tpu_custom_call.1} parent=1 // pred_fallthru
      _
    %583 = vsyncpa [#allocation3], 1
    %584 = vsyncpa [#allocation6], 1
    %585 = vsyncpa [#allocation9], 1
    %586 = vsyncpa [#allocation4], 1

// kernel: tpu_custom_call.1
$region0: #{tpu_custom_call.1}
  #allocation0 [shape = 'u32[]', space=smem, size = 0x4, offset = 0x4, fixed_abs, tag = 'smem constant byte address 0x4 - core index']
  #allocation1 [shape = 'u32[144,128]{1,0:T(1,128)}', space=vmem, size = 0x12000, scoped, tag = 'internal scratch']
  %s0 = inlined_call_operand.hbm [shape: bf16[8,128], index: 0, kind: input, shape index: {}]
  %s1 = inlined_call_operand.hbm [shape: bf16[128,128], index: 1, kind: input, shape index: {}]
  %s2 = inlined_call_operand.vmem [shape: f32[1,128], index: 2, kind: input, shape index: {}]
  %s3 = inlined_call_operand.hbm [shape: bf16[128,128], index: 3, kind: input, shape index: {}]
  %s4 = inlined_call_operand.vmem [shape: f32[1,128], index: 4, kind: input, shape index: {}]
  %s5 = inlined_call_operand.hbm [shape: bf16[128,128], index: 5, kind: input, shape index: {}]
  %s6 = inlined_call_operand.vmem [shape: f32[1,128], index: 6, kind: input, shape index: {}]
  %s7 = inlined_call_operand.hbm [shape: bf16[128,128], index: 7, kind: input, shape index: {}]
  %s8 = inlined_call_operand.vmem [shape: f32[1,128], index: 8, kind: input, shape index: {}]
  %s9 = inlined_call_operand.hbm [shape: f32[8,128], index: 9, kind: output, shape index: {}]
  %s10 = sld [smem:[#allocation0]]
  $region66: #{tpu_custom_call.1} parent=0
    _
  %s12 = ssub.s32 1, %s10
  %s13 = scalar_select 0, %s12, %s10
  $region1: #{tpu_custom_call.1} parent=0
    #allocation2 [shape = 'u8[2048]{0}', space=vmem, size = 0x800, scoped, tag = 'input window, operand 0, single buffered']
    #allocation3 [shape = 's32[1]{0}', space=sflag, size = 0x4, scoped, tag = 'scoped memory for tpu_custom_call.1']
    #allocation4 [shape = 's32[1]{0}', space=sflag, size = 0x4, scoped, tag = 'scoped memory for tpu_custom_call.1']
    #allocation5 [shape = 'u8[32768]{0}', space=vmem, size = 0x8000, scoped, tag = 'input window, operand 1, single buffered']
    #allocation6 [shape = 's32[1]{0}', space=sflag, size = 0x4, scoped, tag = 'scoped memory for tpu_custom_call.1']
    #allocation7 [shape = 'u8[32768]{0}', space=vmem, size = 0x8000, scoped, tag = 'input window, operand 3, single buffered']
    #allocation8 [shape = 'u8[32768]{0}', space=vmem, size = 0x8000, scoped, tag = 'input window, operand 5, single buffered']
    #allocation9 [shape = 's32[1]{0}', space=sflag, size = 0x4, scoped, tag = 'scoped memory for tpu_custom_call.1']
    #allocation10 [shape = 'u8[32768]{0}', space=vmem, size = 0x8000, scoped, tag = 'input window, operand 7, single buffered']
    #allocation11 [shape = 'u8[4096]{0}', space=vmem, size = 0x1000, scoped, tag = 'output window, operand 0, single buffered']
    %14 = vsyncpa [#allocation3], 0
    %15 = vsyncpa [#allocation6], 0
    %16 = vsyncpa [#allocation9], 0
    %17 = vsyncpa [#allocation4], 0
    // Predicated region
    $region2: #{tpu_custom_call.1} parent=1 // pred_check
      _
    $region3: #{tpu_custom_call.1} parent=1 // pred_check_branch
      %19 = sbr.rel (0) target = $region5
    $region4: #{tpu_custom_call.1} parent=1 // pred_region
      %s21 = ssub.s32 64, 64
      %22 = vsyncadd [#allocation3], %s21
      %s24 = sshll.u32 [#allocation2], 4
      %s25 = int_to_ptr.vmem [resolvable:$true] %s24
      %27 = dma.hbm_to_vmem [thread:$0]  %s0, 64, %s25, [#allocation3]
    $region5: #{tpu_custom_call.1} parent=1 // pred_fallthru
      _
    // Predicated region
    $region6: #{tpu_custom_call.1} parent=1 // pred_check
      _
    $region7: #{tpu_custom_call.1} parent=1 // pred_check_branch
      %29 = sbr.rel (0) target = $region9
    $region8: #{tpu_custom_call.1} parent=1 // pred_region
      %s31 = ssub.s32 1024, 1024
      %32 = vsyncadd [#allocation6], %s31
      %s33 = sshll.u32 [#allocation5], 4
      %s34 = int_to_ptr.vmem [resolvable:$true] %s33
      %39 = dma.hbm_to_vmem [thread:$0]  %s1, 1024, %s34, [#allocation6], 64, 64, 4
    $region9: #{tpu_custom_call.1} parent=1 // pred_fallthru
      _
    // Predicated region
    $region10: #{tpu_custom_call.1} parent=1 // pred_check
      _
    $region11: #{tpu_custom_call.1} parent=1 // pred_check_branch
      %41 = sbr.rel (0) target = $region13
    $region12: #{tpu_custom_call.1} parent=1 // pred_region
      _
    $region13: #{tpu_custom_call.1} parent=1 // pred_fallthru
      _
    // Predicated region
    $region14: #{tpu_custom_call.1} parent=1 // pred_check
      _
    $region15: #{tpu_custom_call.1} parent=1 // pred_check_branch
      %43 = sbr.rel (0) target = $region17
    $region16: #{tpu_custom_call.1} parent=1 // pred_region
      %s45 = ssub.s32 1024, 1024
      %46 = vsyncadd [#allocation6], %s45
      %s47 = sshll.u32 [#allocation7], 4
      %s48 = int_to_ptr.vmem [resolvable:$true] %s47
      %53 = dma.hbm_to_vmem [thread:$0]  %s3, 1024, %s48, [#allocation6], 64, 64, 4
    $region17: #{tpu_custom_call.1} parent=1 // pred_fallthru
      _
    // Predicated region
    $region18: #{tpu_custom_call.1} parent=1 // pred_check
      _
    $region19: #{tpu_custom_call.1} parent=1 // pred_check_branch
      %55 = sbr.rel (0) target = $region21
    $region20: #{tpu_custom_call.1} parent=1 // pred_region
      _
    $region21: #{tpu_custom_call.1} parent=1 // pred_fallthru
      _
    // Predicated region
    $region22: #{tpu_custom_call.1} parent=1 // pred_check
      _
    $region23: #{tpu_custom_call.1} parent=1 // pred_check_branch
      %57 = sbr.rel (0) target = $region25
    $region24: #{tpu_custom_call.1} parent=1 // pred_region
      %s59 = ssub.s32 1024, 1024
      %60 = vsyncadd [#allocation9], %s59
      %s61 = sshll.u32 [#allocation8], 4
      %s62 = int_to_ptr.vmem [resolvable:$true] %s61
      %67 = dma.hbm_to_vmem [thread:$0]  %s5, 1024, %s62, [#allocation9], 64, 64, 4
    $region25: #{tpu_custom_call.1} parent=1 // pred_fallthru
      _
    // Predicated region
    $region26: #{tpu_custom_call.1} parent=1 // pred_check
      _
    $region27: #{tpu_custom_call.1} parent=1 // pred_check_branch
      %69 = sbr.rel (0) target = $region29
    $region28: #{tpu_custom_call.1} parent=1 // pred_region
      _
    $region29: #{tpu_custom_call.1} parent=1 // pred_fallthru
      _
    // Predicated region
    $region30: #{tpu_custom_call.1} parent=1 // pred_check
      _
    $region31: #{tpu_custom_call.1} parent=1 // pred_check_branch
      %71 = sbr.rel (0) target = $region33
    $region32: #{tpu_custom_call.1} parent=1 // pred_region
      %s73 = ssub.s32 1024, 1024
      %74 = vsyncadd [#allocation9], %s73
      %s75 = sshll.u32 [#allocation10], 4
      %s76 = int_to_ptr.vmem [resolvable:$true] %s75
      %81 = dma.hbm_to_vmem [thread:$0]  %s7, 1024, %s76, [#allocation9], 64, 64, 4
    $region33: #{tpu_custom_call.1} parent=1 // pred_fallthru
      _
    // Predicated region
    $region34: #{tpu_custom_call.1} parent=1 // pred_check
      _
    $region35: #{tpu_custom_call.1} parent=1 // pred_check_branch
      %83 = sbr.rel (0) target = $region37
    $region36: #{tpu_custom_call.1} parent=1 // pred_region
      _
    $region37: #{tpu_custom_call.1} parent=1 // pred_fallthru
      _
    // Predicated region
    $region38: #{tpu_custom_call.1} parent=1 // pred_check
      _
    $region39: #{tpu_custom_call.1} parent=1 // pred_check_branch
      %85 = sbr.rel (0) target = $region41
    $region40: #{tpu_custom_call.1} parent=1 // pred_region
      %86 = dma.done [#allocation3], 64
    $region41: #{tpu_custom_call.1} parent=1 // pred_fallthru
      _
    // Predicated region
    $region42: #{tpu_custom_call.1} parent=1 // pred_check
      _
    $region43: #{tpu_custom_call.1} parent=1 // pred_check_branch
      %88 = sbr.rel (0) target = $region45
    $region44: #{tpu_custom_call.1} parent=1 // pred_region
      %89 = dma.done [#allocation6], 1024
    $region45: #{tpu_custom_call.1} parent=1 // pred_fallthru
      _
    // Predicated region
    $region46: #{tpu_custom_call.1} parent=1 // pred_check
      _
    $region47: #{tpu_custom_call.1} parent=1 // pred_check_branch
      %91 = sbr.rel (0) target = $region49
    $region48: #{tpu_custom_call.1} parent=1 // pred_region
      %92 = dma.done [#allocation6], 1024
    $region49: #{tpu_custom_call.1} parent=1 // pred_fallthru
      _
    // Predicated region
    $region50: #{tpu_custom_call.1} parent=1 // pred_check
      _
    $region51: #{tpu_custom_call.1} parent=1 // pred_check_branch
      %94 = sbr.rel (0) target = $region53
    $region52: #{tpu_custom_call.1} parent=1 // pred_region
      %95 = dma.done [#allocation9], 1024
    $region53: #{tpu_custom_call.1} parent=1 // pred_fallthru
      _
    // Predicated region
    $region54: #{tpu_custom_call.1} parent=1 // pred_check
      _
    $region55: #{tpu_custom_call.1} parent=1 // pred_check_branch
      %97 = sbr.rel (0) target = $region57
    $region56: #{tpu_custom_call.1} parent=1 // pred_region
      %98 = dma.done [#allocation9], 1024
    $region57: #{tpu_custom_call.1} parent=1 // pred_fallthru
      _
    %v100 = vld [vmem:[#allocation2] sm:$0xf]
    %v101 = vld [vmem:[#allocation5] sm:$0xf]
    %v102 = vld [vmem:[#allocation5 + $0x4] sm:$0xf]
    %v103 = vld [vmem:[#allocation5 + $0x8] sm:$0xf]
    %v104 = vld [vmem:[#allocation5 + $0xc] sm:$0xf]
    %v105 = vld [vmem:[#allocation5 + $0x10] sm:$0xf]
    %v106 = vld [vmem:[#allocation5 + $0x14] sm:$0xf]
    %v107 = vld [vmem:[#allocation5 + $0x18] sm:$0xf]
    %v108 = vld [vmem:[#allocation5 + $0x1c] sm:$0xf]
    %v109 = vld [vmem:[#allocation5 + $0x20] sm:$0xf]
    %v110 = vld [vmem:[#allocation5 + $0x24] sm:$0xf]
    %v111 = vld [vmem:[#allocation5 + $0x28] sm:$0xf]
    %v112 = vld [vmem:[#allocation5 + $0x2c] sm:$0xf]
    %v113 = vld [vmem:[#allocation5 + $0x30] sm:$0xf]
    %v114 = vld [vmem:[#allocation5 + $0x34] sm:$0xf]
    %v115 = vld [vmem:[#allocation5 + $0x38] sm:$0xf]
    %v116 = vld [vmem:[#allocation5 + $0x3c] sm:$0xf]
    %v117 = vld [vmem:[%s2] sm:$0x1]
    %v119 = vlaneseq
    %v120 = vshrl.u32 %v119, 7
    %v121 = vsub.s32 0, %v120
    %v122 = vrot.slane %v117, %v121
    %v140 = vunpack.c.l.b16 %v101
    %v141 = vunpack.c.l.b16 %v102
    %v142 = vunpack.c.l.b16 %v103
    %v143 = vunpack.c.l.b16 %v104
    %v144 = vunpack.c.l.b16 %v105
    %v145 = vunpack.c.l.b16 %v106
    %v146 = vunpack.c.l.b16 %v107
    %v147 = vunpack.c.l.b16 %v108
    %v148 = vunpack.c.l.b16 %v109
    %v149 = vunpack.c.l.b16 %v110
    %v150 = vunpack.c.l.b16 %v111
    %v151 = vunpack.c.l.b16 %v112
    %v152 = vunpack.c.l.b16 %v113
    %v153 = vunpack.c.l.b16 %v114
    %v154 = vunpack.c.l.b16 %v115
    %v155 = vunpack.c.l.b16 %v116
    %v156 = vpack.c.b16 %v141, %v140
    %v157 = vpack.c.b16 %v143, %v142
    %v158 = vpack.c.b16 %v145, %v144
    %v159 = vpack.c.b16 %v147, %v146
    %v160 = vpack.c.b16 %v149, %v148
    %v161 = vpack.c.b16 %v151, %v150
    %v162 = vpack.c.b16 %v153, %v152
    %v163 = vpack.c.b16 %v155, %v154
    %172 = vmatprep.subr.bf16.mxu0 0
    %173 = vmatpush1.bf16.msra.mxu0 %v156
    %174 = vmatprep.subr.bf16.mxu0 0
    %175 = vmatpush1.bf16.msra.mxu0 %v157
    %176 = vmatprep.subr.bf16.mxu0 0
    %177 = vmatpush1.bf16.msra.mxu0 %v158
    %178 = vmatprep.subr.bf16.mxu0 0
    %179 = vmatpush1.bf16.msra.mxu0 %v159
    %180 = vmatprep.subr.bf16.mxu0 0
    %181 = vmatpush1.bf16.msra.mxu0 %v160
    %182 = vmatprep.subr.bf16.mxu0 0
    %183 = vmatpush1.bf16.msra.mxu0 %v161
    %184 = vmatprep.subr.bf16.mxu0 0
    %185 = vmatpush1.bf16.msra.mxu0 %v162
    %186 = vmatprep.subr.bf16.mxu0 0
    %187 = vmatpush1.bf16.msra.mxu0 %v163
    %188 = vmatprep.subr.bf16.mxu0 0
    %189 = vmatpush1.bf16.msra.mxu0 0
    %190 = vmatprep.subr.bf16.mxu0 0
    %191 = vmatpush1.bf16.msra.mxu0 0
    %192 = vmatprep.subr.bf16.mxu0 0
    %193 = vmatpush1.bf16.msra.mxu0 0
    %194 = vmatprep.subr.bf16.mxu0 0
    %195 = vmatpush1.bf16.msra.mxu0 0
    %196 = vmatprep.subr.bf16.mxu0 0
    %197 = vmatpush1.bf16.msra.mxu0 0
    %198 = vmatprep.subr.bf16.mxu0 0
    %199 = vmatpush1.bf16.msra.mxu0 0
    %200 = vmatprep.subr.bf16.mxu0 0
    %201 = vmatpush1.bf16.msra.mxu0 0
    %202 = vmatprep.subr.bf16.mxu0 0
    %203 = vmatpush1.bf16.msra.mxu0 0
    %204 = vmatprep.mubr.bf16.mxu0 0
    %205 = vmatmul.mubr.bf16.gmra.mrb[0].mxu0 %v100
    %v206 = vpop.f32.mrb[0].mxu0
    %v207 = vadd.f32 %v122, %v206
    %v208 = vpop.f32.mrb[0].mxu0
    %v209 = vpop.f32.mrb[0].mxu0
    %v210 = vpop.f32.mrb[0].mxu0
    %211 = vdwg.mxu0
    %v212 = vxor.u32 %v207, 2147483648
    %v213 = vmul.f32 %v212, 1.442695
    %v214 = vpow.pop %v213
    %v215 = vadd.f32 %v214, 1.0
    %v216 = vrcp.pop %v215
    %v217 = vmul.f32 1.0, %v216
    %v218 = vmul.f32 %v207, %v217
    %v219 = vld [vmem:[#allocation7] sm:$0xf]
    %v220 = vld [vmem:[#allocation7 + $0x4] sm:$0xf]
    %v221 = vld [vmem:[#allocation7 + $0x8] sm:$0xf]
    %v222 = vld [vmem:[#allocation7 + $0xc] sm:$0xf]
    %v223 = vld [vmem:[#allocation7 + $0x10] sm:$0xf]
    %v224 = vld [vmem:[#allocation7 + $0x14] sm:$0xf]
    %v225 = vld [vmem:[#allocation7 + $0x18] sm:$0xf]
    %v226 = vld [vmem:[#allocation7 + $0x1c] sm:$0xf]
    %v227 = vld [vmem:[#allocation7 + $0x20] sm:$0xf]
    %v228 = vld [vmem:[#allocation7 + $0x24] sm:$0xf]
    %v229 = vld [vmem:[#allocation7 + $0x28] sm:$0xf]
    %v230 = vld [vmem:[#allocation7 + $0x2c] sm:$0xf]
    %v231 = vld [vmem:[#allocation7 + $0x30] sm:$0xf]
    %v232 = vld [vmem:[#allocation7 + $0x34] sm:$0xf]
    %v233 = vld [vmem:[#allocation7 + $0x38] sm:$0xf]
    %v234 = vld [vmem:[#allocation7 + $0x3c] sm:$0xf]
    %v235 = vld [vmem:[%s4] sm:$0x1]
    %v236 = vpack.c.bf16 %v218, %v218
    %v238 = vlaneseq
    %v239 = vshrl.u32 %v238, 7
    %v240 = vsub.s32 0, %v239
    %v241 = vrot.slane %v235, %v240
    %v259 = vunpack.c.l.b16 %v219
    %v260 = vunpack.c.l.b16 %v220
    %v261 = vunpack.c.l.b16 %v221
    %v262 = vunpack.c.l.b16 %v222
    %v263 = vunpack.c.l.b16 %v223
    %v264 = vunpack.c.l.b16 %v224
    %v265 = vunpack.c.l.b16 %v225
    %v266 = vunpack.c.l.b16 %v226
    %v267 = vunpack.c.l.b16 %v227
    %v268 = vunpack.c.l.b16 %v228
    %v269 = vunpack.c.l.b16 %v229
    %v270 = vunpack.c.l.b16 %v230
    %v271 = vunpack.c.l.b16 %v231
    %v272 = vunpack.c.l.b16 %v232
    %v273 = vunpack.c.l.b16 %v233
    %v274 = vunpack.c.l.b16 %v234
    %v275 = vpack.c.b16 %v260, %v259
    %v276 = vpack.c.b16 %v262, %v261
    %v277 = vpack.c.b16 %v264, %v263
    %v278 = vpack.c.b16 %v266, %v265
    %v279 = vpack.c.b16 %v268, %v267
    %v280 = vpack.c.b16 %v270, %v269
    %v281 = vpack.c.b16 %v272, %v271
    %v282 = vpack.c.b16 %v274, %v273
    %291 = vmatprep.subr.bf16.mxu0 0
    %292 = vmatpush1.bf16.msra.mxu0 %v275
    %293 = vmatprep.subr.bf16.mxu0 0
    %294 = vmatpush1.bf16.msra.mxu0 %v276
    %295 = vmatprep.subr.bf16.mxu0 0
    %296 = vmatpush1.bf16.msra.mxu0 %v277
    %297 = vmatprep.subr.bf16.mxu0 0
    %298 = vmatpush1.bf16.msra.mxu0 %v278
    %299 = vmatprep.subr.bf16.mxu0 0
    %300 = vmatpush1.bf16.msra.mxu0 %v279
    %301 = vmatprep.subr.bf16.mxu0 0
    %302 = vmatpush1.bf16.msra.mxu0 %v280
    %303 = vmatprep.subr.bf16.mxu0 0
    %304 = vmatpush1.bf16.msra.mxu0 %v281
    %305 = vmatprep.subr.bf16.mxu0 0
    %306 = vmatpush1.bf16.msra.mxu0 %v282
    %307 = vmatprep.subr.bf16.mxu0 0
    %308 = vmatpush1.bf16.msra.mxu0 0
    %309 = vmatprep.subr.bf16.mxu0 0
    %310 = vmatpush1.bf16.msra.mxu0 0
    %311 = vmatprep.subr.bf16.mxu0 0
    %312 = vmatpush1.bf16.msra.mxu0 0
    %313 = vmatprep.subr.bf16.mxu0 0
    %314 = vmatpush1.bf16.msra.mxu0 0
    %315 = vmatprep.subr.bf16.mxu0 0
    %316 = vmatpush1.bf16.msra.mxu0 0
    %317 = vmatprep.subr.bf16.mxu0 0
    %318 = vmatpush1.bf16.msra.mxu0 0
    %319 = vmatprep.subr.bf16.mxu0 0
    %320 = vmatpush1.bf16.msra.mxu0 0
    %321 = vmatprep.subr.bf16.mxu0 0
    %322 = vmatpush1.bf16.msra.mxu0 0
    %323 = vmatprep.mubr.bf16.mxu0 0
    %324 = vmatmul.mubr.bf16.gmra.mrb[0].mxu0 %v236
    %v325 = vpop.f32.mrb[0].mxu0
    %v326 = vadd.f32 %v241, %v325
    %v327 = vpop.f32.mrb[0].mxu0
    %v328 = vpop.f32.mrb[0].mxu0
    %v329 = vpop.f32.mrb[0].mxu0
    %330 = vdwg.mxu0
    %v331 = vxor.u32 %v326, 2147483648
    %v332 = vmul.f32 %v331, 1.442695
    %v333 = vpow.pop %v332
    %v334 = vadd.f32 %v333, 1.0
    %v335 = vrcp.pop %v334
    %v336 = vmul.f32 1.0, %v335
    %v337 = vmul.f32 %v326, %v336
    %v338 = vld [vmem:[#allocation8] sm:$0xf]
    %v339 = vld [vmem:[#allocation8 + $0x4] sm:$0xf]
    %v340 = vld [vmem:[#allocation8 + $0x8] sm:$0xf]
    %v341 = vld [vmem:[#allocation8 + $0xc] sm:$0xf]
    %v342 = vld [vmem:[#allocation8 + $0x10] sm:$0xf]
    %v343 = vld [vmem:[#allocation8 + $0x14] sm:$0xf]
    %v344 = vld [vmem:[#allocation8 + $0x18] sm:$0xf]
    %v345 = vld [vmem:[#allocation8 + $0x1c] sm:$0xf]
    %v346 = vld [vmem:[#allocation8 + $0x20] sm:$0xf]
    %v347 = vld [vmem:[#allocation8 + $0x24] sm:$0xf]
    %v348 = vld [vmem:[#allocation8 + $0x28] sm:$0xf]
    %v349 = vld [vmem:[#allocation8 + $0x2c] sm:$0xf]
    %v350 = vld [vmem:[#allocation8 + $0x30] sm:$0xf]
    %v351 = vld [vmem:[#allocation8 + $0x34] sm:$0xf]
    %v352 = vld [vmem:[#allocation8 + $0x38] sm:$0xf]
    %v353 = vld [vmem:[#allocation8 + $0x3c] sm:$0xf]
    %v354 = vld [vmem:[%s6] sm:$0x1]
    %v355 = vpack.c.bf16 %v337, %v337
    %v357 = vlaneseq
    %v358 = vshrl.u32 %v357, 7
    %v359 = vsub.s32 0, %v358
    %v360 = vrot.slane %v354, %v359
    %v378 = vunpack.c.l.b16 %v338
    %v379 = vunpack.c.l.b16 %v339
    %v380 = vunpack.c.l.b16 %v340
    %v381 = vunpack.c.l.b16 %v341
    %v382 = vunpack.c.l.b16 %v342
    %v383 = vunpack.c.l.b16 %v343
    %v384 = vunpack.c.l.b16 %v344
    %v385 = vunpack.c.l.b16 %v345
    %v386 = vunpack.c.l.b16 %v346
    %v387 = vunpack.c.l.b16 %v347
    %v388 = vunpack.c.l.b16 %v348
    %v389 = vunpack.c.l.b16 %v349
    %v390 = vunpack.c.l.b16 %v350
    %v391 = vunpack.c.l.b16 %v351
    %v392 = vunpack.c.l.b16 %v352
    %v393 = vunpack.c.l.b16 %v353
    %v394 = vpack.c.b16 %v379, %v378
    %v395 = vpack.c.b16 %v381, %v380
    %v396 = vpack.c.b16 %v383, %v382
    %v397 = vpack.c.b16 %v385, %v384
    %v398 = vpack.c.b16 %v387, %v386
    %v399 = vpack.c.b16 %v389, %v388
    %v400 = vpack.c.b16 %v391, %v390
    %v401 = vpack.c.b16 %v393, %v392
    %410 = vmatprep.subr.bf16.mxu0 0
    %411 = vmatpush1.bf16.msra.mxu0 %v394
    %412 = vmatprep.subr.bf16.mxu0 0
    %413 = vmatpush1.bf16.msra.mxu0 %v395
    %414 = vmatprep.subr.bf16.mxu0 0
    %415 = vmatpush1.bf16.msra.mxu0 %v396
    %416 = vmatprep.subr.bf16.mxu0 0
    %417 = vmatpush1.bf16.msra.mxu0 %v397
    %418 = vmatprep.subr.bf16.mxu0 0
    %419 = vmatpush1.bf16.msra.mxu0 %v398
    %420 = vmatprep.subr.bf16.mxu0 0
    %421 = vmatpush1.bf16.msra.mxu0 %v399
    %422 = vmatprep.subr.bf16.mxu0 0
    %423 = vmatpush1.bf16.msra.mxu0 %v400
    %424 = vmatprep.subr.bf16.mxu0 0
    %425 = vmatpush1.bf16.msra.mxu0 %v401
    %426 = vmatprep.subr.bf16.mxu0 0
    %427 = vmatpush1.bf16.msra.mxu0 0
    %428 = vmatprep.subr.bf16.mxu0 0
    %429 = vmatpush1.bf16.msra.mxu0 0
    %430 = vmatprep.subr.bf16.mxu0 0
    %431 = vmatpush1.bf16.msra.mxu0 0
    %432 = vmatprep.subr.bf16.mxu0 0
    %433 = vmatpush1.bf16.msra.mxu0 0
    %434 = vmatprep.subr.bf16.mxu0 0
    %435 = vmatpush1.bf16.msra.mxu0 0
    %436 = vmatprep.subr.bf16.mxu0 0
    %437 = vmatpush1.bf16.msra.mxu0 0
    %438 = vmatprep.subr.bf16.mxu0 0
    %439 = vmatpush1.bf16.msra.mxu0 0
    %440 = vmatprep.subr.bf16.mxu0 0
    %441 = vmatpush1.bf16.msra.mxu0 0
    %442 = vmatprep.mubr.bf16.mxu0 0
    %443 = vmatmul.mubr.bf16.gmra.mrb[0].mxu0 %v355
    %v444 = vpop.f32.mrb[0].mxu0
    %v445 = vadd.f32 %v360, %v444
    %v446 = vpop.f32.mrb[0].mxu0
    %v447 = vpop.f32.mrb[0].mxu0
    %v448 = vpop.f32.mrb[0].mxu0
    %449 = vdwg.mxu0
    %v450 = vxor.u32 %v445, 2147483648
    %v451 = vmul.f32 %v450, 1.442695
    %v452 = vpow.pop %v451
    %v453 = vadd.f32 %v452, 1.0
    %v454 = vrcp.pop %v453
    %v455 = vmul.f32 1.0, %v454
    %v456 = vmul.f32 %v445, %v455
    %v457 = vld [vmem:[#allocation10] sm:$0xf]
    %v458 = vld [vmem:[#allocation10 + $0x4] sm:$0xf]
    %v459 = vld [vmem:[#allocation10 + $0x8] sm:$0xf]
    %v460 = vld [vmem:[#allocation10 + $0xc] sm:$0xf]
    %v461 = vld [vmem:[#allocation10 + $0x10] sm:$0xf]
    %v462 = vld [vmem:[#allocation10 + $0x14] sm:$0xf]
    %v463 = vld [vmem:[#allocation10 + $0x18] sm:$0xf]
    %v464 = vld [vmem:[#allocation10 + $0x1c] sm:$0xf]
    %v465 = vld [vmem:[#allocation10 + $0x20] sm:$0xf]
    %v466 = vld [vmem:[#allocation10 + $0x24] sm:$0xf]
    %v467 = vld [vmem:[#allocation10 + $0x28] sm:$0xf]
    %v468 = vld [vmem:[#allocation10 + $0x2c] sm:$0xf]
    %v469 = vld [vmem:[#allocation10 + $0x30] sm:$0xf]
    %v470 = vld [vmem:[#allocation10 + $0x34] sm:$0xf]
    %v471 = vld [vmem:[#allocation10 + $0x38] sm:$0xf]
    %v472 = vld [vmem:[#allocation10 + $0x3c] sm:$0xf]
    %v473 = vld [vmem:[%s8] sm:$0x1]
    %v474 = vpack.c.bf16 %v456, %v456
    %v476 = vlaneseq
    %v477 = vshrl.u32 %v476, 7
    %v478 = vsub.s32 0, %v477
    %v479 = vrot.slane %v473, %v478
    %v497 = vunpack.c.l.b16 %v457
    %v498 = vunpack.c.l.b16 %v458
    %v499 = vunpack.c.l.b16 %v459
    %v500 = vunpack.c.l.b16 %v460
    %v501 = vunpack.c.l.b16 %v461
    %v502 = vunpack.c.l.b16 %v462
    %v503 = vunpack.c.l.b16 %v463
    %v504 = vunpack.c.l.b16 %v464
    %v505 = vunpack.c.l.b16 %v465
    %v506 = vunpack.c.l.b16 %v466
    %v507 = vunpack.c.l.b16 %v467
    %v508 = vunpack.c.l.b16 %v468
    %v509 = vunpack.c.l.b16 %v469
    %v510 = vunpack.c.l.b16 %v470
    %v511 = vunpack.c.l.b16 %v471
    %v512 = vunpack.c.l.b16 %v472
    %v513 = vpack.c.b16 %v498, %v497
    %v514 = vpack.c.b16 %v500, %v499
    %v515 = vpack.c.b16 %v502, %v501
    %v516 = vpack.c.b16 %v504, %v503
    %v517 = vpack.c.b16 %v506, %v505
    %v518 = vpack.c.b16 %v508, %v507
    %v519 = vpack.c.b16 %v510, %v509
    %v520 = vpack.c.b16 %v512, %v511
    %529 = vmatprep.subr.bf16.mxu0 0
    %530 = vmatpush1.bf16.msra.mxu0 %v513
    %531 = vmatprep.subr.bf16.mxu0 0
    %532 = vmatpush1.bf16.msra.mxu0 %v514
    %533 = vmatprep.subr.bf16.mxu0 0
    %534 = vmatpush1.bf16.msra.mxu0 %v515
    %535 = vmatprep.subr.bf16.mxu0 0
    %536 = vmatpush1.bf16.msra.mxu0 %v516
    %537 = vmatprep.subr.bf16.mxu0 0
    %538 = vmatpush1.bf16.msra.mxu0 %v517
    %539 = vmatprep.subr.bf16.mxu0 0
    %540 = vmatpush1.bf16.msra.mxu0 %v518
    %541 = vmatprep.subr.bf16.mxu0 0
    %542 = vmatpush1.bf16.msra.mxu0 %v519
    %543 = vmatprep.subr.bf16.mxu0 0
    %544 = vmatpush1.bf16.msra.mxu0 %v520
    %545 = vmatprep.subr.bf16.mxu0 0
    %546 = vmatpush1.bf16.msra.mxu0 0
    %547 = vmatprep.subr.bf16.mxu0 0
    %548 = vmatpush1.bf16.msra.mxu0 0
    %549 = vmatprep.subr.bf16.mxu0 0
    %550 = vmatpush1.bf16.msra.mxu0 0
    %551 = vmatprep.subr.bf16.mxu0 0
    %552 = vmatpush1.bf16.msra.mxu0 0
    %553 = vmatprep.subr.bf16.mxu0 0
    %554 = vmatpush1.bf16.msra.mxu0 0
    %555 = vmatprep.subr.bf16.mxu0 0
    %556 = vmatpush1.bf16.msra.mxu0 0
    %557 = vmatprep.subr.bf16.mxu0 0
    %558 = vmatpush1.bf16.msra.mxu0 0
    %559 = vmatprep.subr.bf16.mxu0 0
    %560 = vmatpush1.bf16.msra.mxu0 0
    %561 = vmatprep.mubr.bf16.mxu0 0
    %562 = vmatmul.mubr.bf16.gmra.mrb[0].mxu0 %v474
    %v563 = vpop.f32.mrb[0].mxu0
    %v564 = vadd.f32 %v479, %v563
    %v565 = vpop.f32.mrb[0].mxu0
    %v566 = vpop.f32.mrb[0].mxu0
    %v567 = vpop.f32.mrb[0].mxu0
    %568 = vdwg.mxu0
    %569 = vst [vmem:[#allocation11] sm:$0xff] %v564
    // Predicated region
    $region58: #{tpu_custom_call.1} parent=1 // pred_check
      _
    $region59: #{tpu_custom_call.1} parent=1 // pred_check_branch
      %571 = sbr.rel (0) target = $region61
    $region60: #{tpu_custom_call.1} parent=1 // pred_region
      %s573 = ssub.s32 128, 128
      %574 = vsyncadd [#allocation4], %s573
      %s576 = sshll.u32 [#allocation11], 4
      %s577 = int_to_ptr.vmem [resolvable:$true] %s576
      %579 = dma.vmem_to_hbm [thread:$0]  %s577, 128, %s9, [#allocation4]
    $region61: #{tpu_custom_call.1} parent=1 // pred_fallthru
      _
    // Predicated region
    $region62: #{tpu_custom_call.1} parent=1 // pred_check
      _
    $region63: #{tpu_custom_call.1} parent=1 // pred_check_branch
      %581 = sbr.rel (0) target = $region65
    $region64: #{tpu_custom_call.1} parent=1 // pred_region
      %582 = dma.done [#allocation4], 128
    $region65: #{tpu_custom_call.1} parent=1 // pred_fallthru
      _
    %583 = vsyncpa [#allocation3], 1
    %584 = vsyncpa [#allocation6], 1
    %585 = vsyncpa [#allocation9], 1
    %586 = vsyncpa [#allocation4], 1

</llo_original>
